<compile_context>
chip_gen: v7x
topology: tpu7x:2x2x1
jax: 0.10.0
libtpu: 0.0.40
codegen_flags: <defaults>
</compile_context>

<pallas_src>
import jax
import jax.numpy as jnp
from jax.experimental import pallas as pl
from jax.experimental.pallas import tpu as pltpu


def _round_up(n, m):
    return ((n + m - 1) // m) * m


def fused_forward(images_nchw, params):
    """conv3x3(pad=1) + ReLU + global-avg-pool + Linear in one pallas_call."""
    x = jnp.transpose(images_nchw, (0, 2, 3, 1)).astype(jnp.float32)  # NHWC
    B, H, W, Cin = x.shape
    Cout = params["conv_w"].shape[1]
    E = params["emb_w"].shape[1]
    K9 = 9 * Cin

    CP = _round_up(Cout, 128)          # lane-dense conv channels
    EP = _round_up(E, 128)             # lane-dense embedding width

    # Padded width rounded to a multiple of 8: dh*Wp tap offsets become
    # sublane-aligned; the extra columns are zeros and masked by pool_vec.
    Wp = _round_up(W + 2, 8)
    S = H * Wp                         # flattened output rows per image
    Fp_raw = (H + 2) * Wp              # flattened padded-image rows
    Fp_pad = _round_up(Fp_raw + 2, 8)  # +2: largest tap offset is 2*Wp + 2

    # Zero-pad spatially (pad=1 + width alignment), flatten (h, w) into one
    # sublane axis; bf16 halves the HBM image bytes (no materialized im2col).
    xp = jnp.pad(x, ((0, 0), (1, 1), (1, Wp - W - 1), (0, 0)))
    xflat = xp.reshape(B, Fp_raw, Cin)
    xflat = jnp.pad(xflat, ((0, 0), (0, Fp_pad - Fp_raw), (0, 0)))
    xflat = xflat.astype(jnp.bfloat16)

    # Conv weight used directly as (9*Cin, CP) -> single K=9*Cin MXU dot.
    w = jnp.pad(params["conv_w"], ((0, 0), (0, CP - Cout))).astype(jnp.bfloat16)
    b = jnp.pad(params["conv_b"].reshape(1, Cout),
                ((0, 0), (0, CP - Cout))).astype(jnp.float32)
    ew = jnp.pad(params["emb_w"],
                 ((0, CP - Cout), (0, EP - E))).astype(jnp.bfloat16)
    eb = jnp.pad(params["emb_b"].reshape(1, E),
                 ((0, 0), (0, EP - E))).astype(jnp.float32)

    # 1/(H*W) on valid columns, 0 on width padding: masking + mean pooling is
    # one MXU dot (no XLU reduce).
    col = jnp.arange(S, dtype=jnp.int32) % Wp
    pool_vec = jnp.where(col < W, 1.0 / (H * W), 0.0).astype(jnp.float32)
    pool_vec = pool_vec.reshape(1, S)

    # Flattened-row offset of each 3x3 tap (dh, dw); dh*Wp are multiples of 8.
    offs = tuple(dh * Wp + dw for dh in range(3) for dw in range(3))

    def kernel(x_ref, w_ref, b_ref, m_ref, ew_ref, eb_ref, out_ref):
        # Lane-concatenate the 9 shifted (S, Cin) taps -> one (S, 9*Cin)
        # operand; a single K=9*Cin dot replaces 9 tiny K=Cin dots + 8 adds.
        taps = [x_ref[0, pl.ds(off, S), :] for off in offs]
        patches = jnp.concatenate(taps, axis=-1)                  # (S, 9*Cin)
        acc = jnp.dot(patches, w_ref[...],
                      preferred_element_type=jnp.float32)         # (S, CP)
        act = jnp.maximum(acc + b_ref[...], 0.0)

        # Masked mean pool as an MXU dot (kept f32 for accumulation accuracy).
        pooled = jnp.dot(m_ref[...], act,
                         preferred_element_type=jnp.float32)      # (1, CP)

        emb = jnp.dot(pooled.astype(ew_ref.dtype), ew_ref[...],
                      preferred_element_type=jnp.float32) + eb_ref[...]
        out_ref[...] = emb[None].astype(out_ref.dtype)            # (1, 1, EP)

    # Cost estimate from the *real* (unpadded) work.
    flops = (B * H * W * (2 * K9 * Cout + 2 * Cout)   # conv + bias/relu
             + B * H * W * 2 * Cout                   # mean pool
             + B * 2 * Cout * E)                      # embedding
    bytes_accessed = int(2 * (B * Fp_pad * Cin + K9 * CP + CP * EP)
                         + 4 * (CP + S + EP + B * EP))

    out = pl.pallas_call(
        kernel,
        out_shape=jax.ShapeDtypeStruct((B, 1, EP), jnp.float32),
        grid=(B,),
        in_specs=[
            pl.BlockSpec((1, Fp_pad, Cin), lambda bi: (bi, 0, 0)),
            pl.BlockSpec((K9, CP), lambda bi: (0, 0)),
            pl.BlockSpec((1, CP), lambda bi: (0, 0)),
            pl.BlockSpec((1, S), lambda bi: (0, 0)),
            pl.BlockSpec((CP, EP), lambda bi: (0, 0)),
            pl.BlockSpec((1, EP), lambda bi: (0, 0)),
        ],
        out_specs=pl.BlockSpec((1, 1, EP), lambda bi: (bi, 0, 0)),
        compiler_params=pltpu.CompilerParams(
            dimension_semantics=("parallel",)),
        cost_estimate=pl.CostEstimate(
            flops=flops, transcendentals=0, bytes_accessed=bytes_accessed),
    )(xflat, w, b, pool_vec, ew, eb)

    return out[:, 0, :E]


def init_params(key, c_in=4, c_out=32, embedding_size=32):
    k1, k2, k3, k4 = jax.random.split(key, 4)
    conv_w = jax.random.normal(k1, (9 * c_in, c_out), jnp.float32) * 0.1
    conv_b = jax.random.normal(k2, (1, c_out), jnp.float32) * 0.01
    emb_w = jax.random.normal(k3, (c_out, embedding_size), jnp.float32) * 0.1
    emb_b = jax.random.normal(k4, (1, embedding_size), jnp.float32) * 0.01
    return {"conv_w": conv_w, "conv_b": conv_b, "emb_w": emb_w, "emb_b": emb_b}


def reference_forward(images_nchw, params):
    x = jnp.transpose(images_nchw, (0, 2, 3, 1))
    B, H, W, Cin = x.shape
    xp = jnp.pad(x, ((0, 0), (1, 1), (1, 1), (0, 0)))
    taps = [xp[:, dh:dh + H, dw:dw + W, :]
            for dh in range(3) for dw in range(3)]
    patches = jnp.stack(taps, axis=3).reshape(B * H * W, 9 * Cin)
    conv = jnp.maximum(patches @ params["conv_w"] + params["conv_b"], 0.0)
    pooled = conv.reshape(B, H * W, -1).mean(axis=1)
    return pooled @ params["emb_w"] + params["emb_b"]


if __name__ == "__main__":
    key = jax.random.PRNGKey(0)
    k_img, k_par = jax.random.split(key)

    B, Cin, H, W = 2, 4, 16, 16
    embedding_size = 32
    images = jax.random.normal(k_img, (B, Cin, H, W), jnp.float32)  # NCHW
    labels = jnp.zeros((B,), jnp.int32)  # unused by forward (interface parity)

    params = init_params(k_par, c_in=Cin, c_out=32,
                         embedding_size=embedding_size)

    emb = jax.block_until_ready(fused_forward(images, params))
    ref = reference_forward(images, params)

    assert emb.shape == (B, embedding_size)
    # bf16 matmul operands with f32 accumulation -> loosened tolerance.
    assert jnp.allclose(emb, ref, rtol=2e-2, atol=2e-2)

    print("KERNEL_OK")
</pallas_src>

<mosaic_0001>
module attributes {stable_mosaic.version = 11 : i64} {
  func.func @kernel(%arg0: i32, %arg1: memref<1x440x4xbf16, #tpu.memory_space<vmem>>, %arg2: memref<36x128xbf16, #tpu.memory_space<vmem>>, %arg3: memref<1x128xf32, #tpu.memory_space<vmem>>, %arg4: memref<1x384xf32, #tpu.memory_space<vmem>>, %arg5: memref<128x128xbf16, #tpu.memory_space<vmem>>, %arg6: memref<1x128xf32, #tpu.memory_space<vmem>>, %arg7: memref<1x1x128xf32, #tpu.memory_space<vmem>>) attributes {dimension_semantics = [#tpu.dimension_semantics<parallel>], iteration_bounds = array<i64: 2>, scalar_prefetch = 0 : i64, scratch_operands = 0 : i64, tpu.core_type = #tpu.core_type<tc>, window_params = [{transform_indices = @transform_0, window_bounds = array<i64: 1, 440, 4>}, {pipeline_mode = #tpu.pipeline_mode<synchronous>, transform_indices = @transform_1, window_bounds = array<i64: 36, 128>}, {pipeline_mode = #tpu.pipeline_mode<synchronous>, transform_indices = @transform_2, window_bounds = array<i64: 1, 128>}, {pipeline_mode = #tpu.pipeline_mode<synchronous>, transform_indices = @transform_3, window_bounds = array<i64: 1, 384>}, {pipeline_mode = #tpu.pipeline_mode<synchronous>, transform_indices = @transform_4, window_bounds = array<i64: 128, 128>}, {pipeline_mode = #tpu.pipeline_mode<synchronous>, transform_indices = @transform_5, window_bounds = array<i64: 1, 128>}, {transform_indices = @transform_6, window_bounds = array<i64: 1, 1, 128>}]} {
    %c0 = arith.constant 0 : index
    %c0_0 = arith.constant 0 : index
    %c0_1 = arith.constant 0 : index
    %0 = vector.load %arg1[%c0, %c0_0, %c0_1] : memref<1x440x4xbf16, #tpu.memory_space<vmem>>, vector<1x384x4xbf16>
    %1 = vector.shape_cast %0 : vector<1x384x4xbf16> to vector<384x4xbf16>
    %c0_2 = arith.constant 0 : index
    %c1 = arith.constant 1 : index
    %c0_3 = arith.constant 0 : index
    %2 = vector.load %arg1[%c0_2, %c1, %c0_3] : memref<1x440x4xbf16, #tpu.memory_space<vmem>>, vector<1x384x4xbf16>
    %3 = vector.shape_cast %2 : vector<1x384x4xbf16> to vector<384x4xbf16>
    %c0_4 = arith.constant 0 : index
    %c2 = arith.constant 2 : index
    %c0_5 = arith.constant 0 : index
    %4 = vector.load %arg1[%c0_4, %c2, %c0_5] : memref<1x440x4xbf16, #tpu.memory_space<vmem>>, vector<1x384x4xbf16>
    %5 = vector.shape_cast %4 : vector<1x384x4xbf16> to vector<384x4xbf16>
    %c0_6 = arith.constant 0 : index
    %c24 = arith.constant 24 : index
    %c0_7 = arith.constant 0 : index
    %6 = vector.load %arg1[%c0_6, %c24, %c0_7] : memref<1x440x4xbf16, #tpu.memory_space<vmem>>, vector<1x384x4xbf16>
    %7 = vector.shape_cast %6 : vector<1x384x4xbf16> to vector<384x4xbf16>
    %c0_8 = arith.constant 0 : index
    %c25 = arith.constant 25 : index
    %c0_9 = arith.constant 0 : index
    %8 = vector.load %arg1[%c0_8, %c25, %c0_9] : memref<1x440x4xbf16, #tpu.memory_space<vmem>>, vector<1x384x4xbf16>
    %9 = vector.shape_cast %8 : vector<1x384x4xbf16> to vector<384x4xbf16>
    %c0_10 = arith.constant 0 : index
    %c26 = arith.constant 26 : index
    %c0_11 = arith.constant 0 : index
    %10 = vector.load %arg1[%c0_10, %c26, %c0_11] : memref<1x440x4xbf16, #tpu.memory_space<vmem>>, vector<1x384x4xbf16>
    %11 = vector.shape_cast %10 : vector<1x384x4xbf16> to vector<384x4xbf16>
    %c0_12 = arith.constant 0 : index
    %c48 = arith.constant 48 : index
    %c0_13 = arith.constant 0 : index
    %12 = vector.load %arg1[%c0_12, %c48, %c0_13] : memref<1x440x4xbf16, #tpu.memory_space<vmem>>, vector<1x384x4xbf16>
    %13 = vector.shape_cast %12 : vector<1x384x4xbf16> to vector<384x4xbf16>
    %c0_14 = arith.constant 0 : index
    %c49 = arith.constant 49 : index
    %c0_15 = arith.constant 0 : index
    %14 = vector.load %arg1[%c0_14, %c49, %c0_15] : memref<1x440x4xbf16, #tpu.memory_space<vmem>>, vector<1x384x4xbf16>
    %15 = vector.shape_cast %14 : vector<1x384x4xbf16> to vector<384x4xbf16>
    %c0_16 = arith.constant 0 : index
    %c50 = arith.constant 50 : index
    %c0_17 = arith.constant 0 : index
    %16 = vector.load %arg1[%c0_16, %c50, %c0_17] : memref<1x440x4xbf16, #tpu.memory_space<vmem>>, vector<1x384x4xbf16>
    %17 = vector.shape_cast %16 : vector<1x384x4xbf16> to vector<384x4xbf16>
    %18 = tpu.concatenate %1, %3, %5, %7, %9, %11, %13, %15, %17 in 1 : vector<384x4xbf16>, vector<384x4xbf16>, vector<384x4xbf16>, vector<384x4xbf16>, vector<384x4xbf16>, vector<384x4xbf16>, vector<384x4xbf16>, vector<384x4xbf16>, vector<384x4xbf16> -> vector<384x36xbf16>
    %c0_18 = arith.constant 0 : index
    %c0_19 = arith.constant 0 : index
    %19 = vector.load %arg2[%c0_18, %c0_19] : memref<36x128xbf16, #tpu.memory_space<vmem>>, vector<36x128xbf16>
    %cst = arith.constant dense<0.000000e+00> : vector<384x128xf32>
    %20 = tpu.matmul %18, %19, %cst {dimension_numbers = #tpu.dot_dimension_numbers<[1], [0], [0], [1], [0, 0, 1, 1], [], []>} : vector<384x36xbf16>, vector<36x128xbf16>, vector<384x128xf32> -> vector<384x128xf32>
    %c0_20 = arith.constant 0 : index
    %c0_21 = arith.constant 0 : index
    %21 = vector.load %arg3[%c0_20, %c0_21] : memref<1x128xf32, #tpu.memory_space<vmem>>, vector<1x128xf32>
    %22 = vector.broadcast %21 : vector<1x128xf32> to vector<384x128xf32>
    %23 = arith.addf %20, %22 : vector<384x128xf32>
    %cst_22 = arith.constant 0.000000e+00 : f32
    %24 = vector.broadcast %cst_22 : f32 to vector<384x128xf32>
    %25 = arith.maximumf %23, %24 : vector<384x128xf32>
    %c0_23 = arith.constant 0 : index
    %c0_24 = arith.constant 0 : index
    %26 = vector.load %arg4[%c0_23, %c0_24] : memref<1x384xf32, #tpu.memory_space<vmem>>, vector<1x384xf32>
    %cst_25 = arith.constant dense<0.000000e+00> : vector<1x128xf32>
    %27 = tpu.matmul %26, %25, %cst_25 {dimension_numbers = #tpu.dot_dimension_numbers<[1], [0], [0], [1], [0, 0, 1, 1], [], []>} : vector<1x384xf32>, vector<384x128xf32>, vector<1x128xf32> -> vector<1x128xf32>
    %28 = arith.truncf %27 : vector<1x128xf32> to vector<1x128xbf16>
    %c0_26 = arith.constant 0 : index
    %c0_27 = arith.constant 0 : index
    %29 = vector.load %arg5[%c0_26, %c0_27] : memref<128x128xbf16, #tpu.memory_space<vmem>>, vector<128x128xbf16>
    %cst_28 = arith.constant dense<0.000000e+00> : vector<1x128xf32>
    %30 = tpu.matmul %28, %29, %cst_28 {dimension_numbers = #tpu.dot_dimension_numbers<[1], [0], [0], [1], [0, 0, 1, 1], [], []>} : vector<1x128xbf16>, vector<128x128xbf16>, vector<1x128xf32> -> vector<1x128xf32>
    %c0_29 = arith.constant 0 : index
    %c0_30 = arith.constant 0 : index
    %31 = vector.load %arg6[%c0_29, %c0_30] : memref<1x128xf32, #tpu.memory_space<vmem>>, vector<1x128xf32>
    %32 = arith.addf %30, %31 : vector<1x128xf32>
    %33 = vector.shape_cast %32 : vector<1x128xf32> to vector<1x1x128xf32>
    %c0_31 = arith.constant 0 : index
    %c0_32 = arith.constant 0 : index
    %c0_33 = arith.constant 0 : index
    %34 = vector.load %arg7[%c0_31, %c0_32, %c0_33] : memref<1x1x128xf32, #tpu.memory_space<vmem>>, vector<1x1x128xf32>
    tpu.vector_store %arg7[%c0_31, %c0_32, %c0_33], %33 {strides = array<i32>} : memref<1x1x128xf32, #tpu.memory_space<vmem>>, vector<1x1x128xf32>,
    return
  }
  func.func @transform_0(%arg0: i32) -> (i32, i32, i32) {
    %c0_i32 = arith.constant 0 : i32
    %c0_i32_0 = arith.constant 0 : i32
    %c0_i32_1 = arith.constant 0 : i32
    return %arg0, %c0_i32, %c0_i32_0 : i32, i32, i32
  }
  func.func @transform_1(%arg0: i32) -> (i32, i32) {
    %c0_i32 = arith.constant 0 : i32
    %c0_i32_0 = arith.constant 0 : i32
    %c0_i32_1 = arith.constant 0 : i32
    return %c0_i32, %c0_i32_0 : i32, i32
  }
  func.func @transform_2(%arg0: i32) -> (i32, i32) {
    %c0_i32 = arith.constant 0 : i32
    %c0_i32_0 = arith.constant 0 : i32
    %c0_i32_1 = arith.constant 0 : i32
    return %c0_i32, %c0_i32_0 : i32, i32
  }
  func.func @transform_3(%arg0: i32) -> (i32, i32) {
    %c0_i32 = arith.constant 0 : i32
    %c0_i32_0 = arith.constant 0 : i32
    %c0_i32_1 = arith.constant 0 : i32
    return %c0_i32, %c0_i32_0 : i32, i32
  }
  func.func @transform_4(%arg0: i32) -> (i32, i32) {
    %c0_i32 = arith.constant 0 : i32
    %c0_i32_0 = arith.constant 0 : i32
    %c0_i32_1 = arith.constant 0 : i32
    return %c0_i32, %c0_i32_0 : i32, i32
  }
  func.func @transform_5(%arg0: i32) -> (i32, i32) {
    %c0_i32 = arith.constant 0 : i32
    %c0_i32_0 = arith.constant 0 : i32
    %c0_i32_1 = arith.constant 0 : i32
    return %c0_i32, %c0_i32_0 : i32, i32
  }
  func.func @transform_6(%arg0: i32) -> (i32, i32, i32) {
    %c0_i32 = arith.constant 0 : i32
    %c0_i32_0 = arith.constant 0 : i32
    %c0_i32_1 = arith.constant 0 : i32
    return %arg0, %c0_i32, %c0_i32_0 : i32, i32, i32
  }
}

</mosaic_0001>

<llo_original>
// kernel: tpu_custom_call.1
$region0: #{tpu_custom_call.1}
  #allocation0 [shape = 'u32[]', space=smem, size = 0x4, offset = 0x4, fixed_abs, tag = 'smem constant byte address 0x4 - core index']
  #allocation1 [shape = 'u32[144,128]{1,0:T(1,128)}', space=vmem, size = 0x12000, scoped, tag = 'internal scratch']
  %s0 = inlined_call_operand.vmem [shape: bf16[2,440,4], index: 0, kind: input, shape index: {}]
  %s1 = inlined_call_operand.vmem [shape: bf16[36,128], index: 1, kind: input, shape index: {}]
  %s2 = inlined_call_operand.vmem [shape: f32[1,128], index: 2, kind: input, shape index: {}]
  %s3 = inlined_call_operand.vmem [shape: f32[1,384], index: 3, kind: input, shape index: {}]
  %s4 = inlined_call_operand.vmem [shape: bf16[128,128], index: 4, kind: input, shape index: {}]
  %s5 = inlined_call_operand.vmem [shape: f32[1,128], index: 5, kind: input, shape index: {}]
  %s6 = inlined_call_operand.hbm [shape: f32[2,1,128], index: 6, kind: output, shape index: {}]
  %s7 = sld [smem:[#allocation0]]
  $region57: #{tpu_custom_call.1} parent=0
    _
  %s9 = ssub.s32 1, %s7
  %s10 = scalar_select 0, %s9, %s7
  $region1: #{tpu_custom_call.1} parent=0
    #allocation2 [shape = 'u8[1024]{0}', space=vmem, size = 0x400, scoped, tag = 'output window, operand 0']
    #allocation3 [shape = 's32[2]{0}', space=sflag, size = 0x8, scoped, tag = 'scoped memory for tpu_custom_call.1']
    %11 = vsyncpa [#allocation3], 0
    %s12 = scalar_lea.sflag [#allocation3], 1
    %13 = vsyncpa %s12, 0
    loop: start=0, step=1, limit=4
    $region2: #{tpu_custom_call.1} parent=1 // loop_pre_header
      _
    $region3: #{tpu_custom_call.1} parent=1 // loop_header
      %s15 = sphi 0, %s19
      %p16 = scmp.ge.s32.totalorder %s15, 4
      %s25 = sphi 0, %s27
      %s28 = sphi 0, %s25
      %s29 = sphi 0, %s28
      %s45 = sphi 0, %s29
      %s49 = sphi 0, %s49
      %s51 = sphi 0, %s49
      %s52 = sphi 0, %s51
      %s66 = sphi 0, %s52
      %s70 = sphi 0, %s70
      %s72 = sphi 0, %s70
      %s73 = sphi 0, %s72
      %s87 = sphi 0, %s73
      %s91 = sphi 0, %s91
      %s93 = sphi 0, %s91
      %s94 = sphi 0, %s93
      %s108 = sphi 0, %s94
      %s112 = sphi 0, %s112
      %s114 = sphi 0, %s112
      %s115 = sphi 0, %s114
      %s129 = sphi 0, %s115
      %s133 = sphi 0, %s133
      %s135 = sphi 0, %s133
      %s136 = sphi 0, %s135
      %s150 = sphi 0, %s136
      %s156 = sphi 0, %s158
      %s159 = sphi 0, %s156
      %s160 = sphi 0, %s159
      %s176 = sphi 0, %s160
    $region4: #{tpu_custom_call.1} parent=1 // loop_header_branch
      %18 = sbr.rel (%p16) target = $region8
    $region5: #{tpu_custom_call.1} parent=1 // loop_body
      %s20 = ssub.s32 %s15, 1
      %s21 = ssub.s32 %s15, 2
      %s22 = sadd.s32 %s15, 1
      %s23 = ssub.s32 %s15, %s22
      %p24 = scmp.eq.s32.totalorder %s23, 0
      %s26 = sadd.s32 %s25, 1
      %s27 = scalar_select %p24, %s25, %s26
      %p30 = pneg %p24
      %p31 = scmp.eq.s32.totalorder %s15, 1
      %p32 = por %p30, %p31
      %p33 = scmp.ne.s32.totalorder %s25, %s28
      %p34 = scmp.eq.s32.totalorder %s15, 0
      %p35 = por %p33, %p34
      %p36 = scmp.ne.s32.totalorder %s25, %s28
      %p37 = scmp.eq.s32.totalorder %s20, 1
      %p38 = por %p36, %p37
      %p39 = scmp.ne.s32.totalorder %s28, %s29
      %p40 = scmp.eq.s32.totalorder %s20, 0
      %p41 = por %p39, %p40
      %p42 = scmp.ne.s32.totalorder %s28, %s29
      %p43 = scmp.eq.s32.totalorder %s21, 1
      %p44 = por %p42, %p43
      %p46 = scmp.ne.s32.totalorder %s29, %s45
      %p47 = scmp.eq.s32.totalorder %s21, 0
      %p48 = por %p46, %p47
      %s50 = sadd.s32 %s49, 1
      %p53 = scmp.eq.s32.totalorder %s15, 1
      %p54 = scmp.ne.s32.totalorder %s49, %s51
      %p55 = scmp.eq.s32.totalorder %s15, 0
      %p56 = por %p54, %p55
      %p57 = scmp.ne.s32.totalorder %s49, %s51
      %p58 = scmp.eq.s32.totalorder %s20, 1
      %p59 = por %p57, %p58
      %p60 = scmp.ne.s32.totalorder %s51, %s52
      %p61 = scmp.eq.s32.totalorder %s20, 0
      %p62 = por %p60, %p61
      %p63 = scmp.ne.s32.totalorder %s51, %s52
      %p64 = scmp.eq.s32.totalorder %s21, 1
      %p65 = por %p63, %p64
      %p67 = scmp.ne.s32.totalorder %s52, %s66
      %p68 = scmp.eq.s32.totalorder %s21, 0
      %p69 = por %p67, %p68
      %s71 = sadd.s32 %s70, 1
      %p74 = scmp.eq.s32.totalorder %s15, 1
      %p75 = scmp.ne.s32.totalorder %s70, %s72
      %p76 = scmp.eq.s32.totalorder %s15, 0
      %p77 = por %p75, %p76
      %p78 = scmp.ne.s32.totalorder %s70, %s72
      %p79 = scmp.eq.s32.totalorder %s20, 1
      %p80 = por %p78, %p79
      %p81 = scmp.ne.s32.totalorder %s72, %s73
      %p82 = scmp.eq.s32.totalorder %s20, 0
      %p83 = por %p81, %p82
      %p84 = scmp.ne.s32.totalorder %s72, %s73
      %p85 = scmp.eq.s32.totalorder %s21, 1
      %p86 = por %p84, %p85
      %p88 = scmp.ne.s32.totalorder %s73, %s87
      %p89 = scmp.eq.s32.totalorder %s21, 0
      %p90 = por %p88, %p89
      %s92 = sadd.s32 %s91, 1
      %p95 = scmp.eq.s32.totalorder %s15, 1
      %p96 = scmp.ne.s32.totalorder %s91, %s93
      %p97 = scmp.eq.s32.totalorder %s15, 0
      %p98 = por %p96, %p97
      %p99 = scmp.ne.s32.totalorder %s91, %s93
      %p100 = scmp.eq.s32.totalorder %s20, 1
      %p101 = por %p99, %p100
      %p102 = scmp.ne.s32.totalorder %s93, %s94
      %p103 = scmp.eq.s32.totalorder %s20, 0
      %p104 = por %p102, %p103
      %p105 = scmp.ne.s32.totalorder %s93, %s94
      %p106 = scmp.eq.s32.totalorder %s21, 1
      %p107 = por %p105, %p106
      %p109 = scmp.ne.s32.totalorder %s94, %s108
      %p110 = scmp.eq.s32.totalorder %s21, 0
      %p111 = por %p109, %p110
      %s113 = sadd.s32 %s112, 1
      %p116 = scmp.eq.s32.totalorder %s15, 1
      %p117 = scmp.ne.s32.totalorder %s112, %s114
      %p118 = scmp.eq.s32.totalorder %s15, 0
      %p119 = por %p117, %p118
      %p120 = scmp.ne.s32.totalorder %s112, %s114
      %p121 = scmp.eq.s32.totalorder %s20, 1
      %p122 = por %p120, %p121
      %p123 = scmp.ne.s32.totalorder %s114, %s115
      %p124 = scmp.eq.s32.totalorder %s20, 0
      %p125 = por %p123, %p124
      %p126 = scmp.ne.s32.totalorder %s114, %s115
      %p127 = scmp.eq.s32.totalorder %s21, 1
      %p128 = por %p126, %p127
      %p130 = scmp.ne.s32.totalorder %s115, %s129
      %p131 = scmp.eq.s32.totalorder %s21, 0
      %p132 = por %p130, %p131
      %s134 = sadd.s32 %s133, 1
      %p137 = scmp.eq.s32.totalorder %s15, 1
      %p138 = scmp.ne.s32.totalorder %s133, %s135
      %p139 = scmp.eq.s32.totalorder %s15, 0
      %p140 = por %p138, %p139
      %p141 = scmp.ne.s32.totalorder %s133, %s135
      %p142 = scmp.eq.s32.totalorder %s20, 1
      %p143 = por %p141, %p142
      %p144 = scmp.ne.s32.totalorder %s135, %s136
      %p145 = scmp.eq.s32.totalorder %s20, 0
      %p146 = por %p144, %p145
      %p147 = scmp.ne.s32.totalorder %s135, %s136
      %p148 = scmp.eq.s32.totalorder %s21, 1
      %p149 = por %p147, %p148
      %p151 = scmp.ne.s32.totalorder %s136, %s150
      %p152 = scmp.eq.s32.totalorder %s21, 0
      %p153 = por %p151, %p152
      %s154 = ssub.s32 %s15, %s22
      %p155 = scmp.eq.s32.totalorder %s154, 0
      %s157 = sadd.s32 %s156, 1
      %s158 = scalar_select %p155, %s156, %s157
      %p161 = pneg %p155
      %p162 = scmp.eq.s32.totalorder %s15, 1
      %p163 = por %p161, %p162
      %p164 = scmp.ne.s32.totalorder %s156, %s159
      %p165 = scmp.eq.s32.totalorder %s15, 0
      %p166 = por %p164, %p165
      %p167 = scmp.ne.s32.totalorder %s156, %s159
      %p168 = scmp.eq.s32.totalorder %s20, 1
      %p169 = por %p167, %p168
      %p170 = scmp.ne.s32.totalorder %s159, %s160
      %p171 = scmp.eq.s32.totalorder %s20, 0
      %p172 = por %p170, %p171
      %p173 = scmp.ne.s32.totalorder %s159, %s160
      %p174 = scmp.eq.s32.totalorder %s21, 1
      %p175 = por %p173, %p174
      %p177 = scmp.ne.s32.totalorder %s160, %s176
      %p178 = scmp.eq.s32.totalorder %s21, 0
      %p179 = por %p177, %p178
      %p180 = scmp.le.s32.totalorder 1, %s15
      %p181 = scmp.lt.s32.totalorder %s15, 3
      %p182 = pnand %p180, %p181
      %p183 = pneg %p182
      // Predicated region
      $region9: #{tpu_custom_call.1} parent=5 // pred_check
        _
      $region10: #{tpu_custom_call.1} parent=5 // pred_check_branch
        %185 = sbr.rel (%p182) target = $region12
      $region11: #{tpu_custom_call.1} parent=5 // pred_region
        %s186 = ssub.s32 %s15, 1
        // Predicated region
        $region13: #{tpu_custom_call.1} parent=11 // pred_check
          %p187 = pneg %p62
        $region14: #{tpu_custom_call.1} parent=11 // pred_check_branch
          %189 = sbr.rel (%p187) target = $region16
        $region15: #{tpu_custom_call.1} parent=11 // pred_region
          _
        $region16: #{tpu_custom_call.1} parent=11 // pred_fallthru
          _
        // Predicated region
        $region17: #{tpu_custom_call.1} parent=11 // pred_check
          %p190 = pneg %p83
        $region18: #{tpu_custom_call.1} parent=11 // pred_check_branch
          %192 = sbr.rel (%p190) target = $region20
        $region19: #{tpu_custom_call.1} parent=11 // pred_region
          _
        $region20: #{tpu_custom_call.1} parent=11 // pred_fallthru
          _
        // Predicated region
        $region21: #{tpu_custom_call.1} parent=11 // pred_check
          %p193 = pneg %p104
        $region22: #{tpu_custom_call.1} parent=11 // pred_check_branch
          %195 = sbr.rel (%p193) target = $region24
        $region23: #{tpu_custom_call.1} parent=11 // pred_region
          _
        $region24: #{tpu_custom_call.1} parent=11 // pred_fallthru
          _
        // Predicated region
        $region25: #{tpu_custom_call.1} parent=11 // pred_check
          %p196 = pneg %p125
        $region26: #{tpu_custom_call.1} parent=11 // pred_check_branch
          %198 = sbr.rel (%p196) target = $region28
        $region27: #{tpu_custom_call.1} parent=11 // pred_region
          _
        $region28: #{tpu_custom_call.1} parent=11 // pred_fallthru
          _
        // Predicated region
        $region29: #{tpu_custom_call.1} parent=11 // pred_check
          %p199 = pneg %p146
        $region30: #{tpu_custom_call.1} parent=11 // pred_check_branch
          %201 = sbr.rel (%p199) target = $region32
        $region31: #{tpu_custom_call.1} parent=11 // pred_region
          _
        $region32: #{tpu_custom_call.1} parent=11 // pred_fallthru
          _
      $region12: #{tpu_custom_call.1} parent=5 // pred_fallthru
        _
      %p202 = scmp.lt.s32.totalorder %s15, 2
      // Predicated region
      $region33: #{tpu_custom_call.1} parent=5 // pred_check
        %p203 = pneg %p202
      $region34: #{tpu_custom_call.1} parent=5 // pred_check_branch
        %205 = sbr.rel (%p203) target = $region36
      $region35: #{tpu_custom_call.1} parent=5 // pred_region
        // Predicated region
        $region37: #{tpu_custom_call.1} parent=35 // pred_check
          %p206 = pneg %p35
        $region38: #{tpu_custom_call.1} parent=35 // pred_check_branch
          %208 = sbr.rel (%p206) target = $region40
        $region39: #{tpu_custom_call.1} parent=35 // pred_region
          %p209 = scmp.lt.s32.totalorder %s15, 1
          %s210 = scalar_select %p209, %s15, 1
          %s211 = smul.addr %s210, 55
          %s212 = smul.addr %s211, 4
          %s213 = scalar_lea.vmem %s0, %s212
        $region40: #{tpu_custom_call.1} parent=35 // pred_fallthru
          _
      $region36: #{tpu_custom_call.1} parent=5 // pred_fallthru
        _
      %p214 = scmp.le.s32.totalorder 1, %s15
      %p215 = scmp.lt.s32.totalorder %s15, 3
      %p216 = pnand %p214, %p215
      %p217 = pneg %p216
      // Predicated region
      $region41: #{tpu_custom_call.1} parent=5 // pred_check
        _
      $region42: #{tpu_custom_call.1} parent=5 // pred_check_branch
        %219 = sbr.rel (%p216) target = $region44
      $region43: #{tpu_custom_call.1} parent=5 // pred_region
        %s220 = ssub.s32 %s15, 1
        %p221 = scmp.lt.s32.totalorder %s20, 1
        %s222 = scalar_select %p221, %s20, 1
        %s223 = smul.addr %s222, 55
        %s224 = smul.addr %s223, 4
        %s225 = scalar_lea.vmem %s0, %s224
        %p226 = pneg %p41
        %p227 = pneg %p38
        %p228 = pneg %p62
        %p229 = pneg %p59
        %p230 = pneg %p83
        %p231 = pneg %p80
        %p232 = pneg %p104
        %p233 = pneg %p101
        %p234 = pneg %p125
        %p235 = pneg %p122
        %p236 = pneg %p146
        %p237 = pneg %p143
        %p238 = pneg %p172
        %p239 = pneg %p169
        %s240 = sand.u32 %s159, 1
        %s241 = scalar_lea.sflag [#allocation3], %s240
        %s242 = sand.u32 %s159, 1
        %s243 = scalar_lea.vmem [#allocation2], %s242
        %p244 = scmp.lt.s32.totalorder %s20, 1
        %s245 = scalar_select %p244, %s20, 1
        %s246 = smul.addr %s245, 55
        %s247 = smul.addr %s246, 4
        %s248 = scalar_lea.vmem %s0, %s247
        %v250 = vld [vmem:[%s248] sm:$0xf]
        %v251 = vld [vmem:[%s248 + $0x4] sm:$0xf]
        %v252 = vld [vmem:[%s248 + $0x8] sm:$0xf]
        %v253 = vld [vmem:[%s248 + $0xc] sm:$0xf]
        %v254 = vld [vmem:[%s248 + $0x10] sm:$0xf]
        %v255 = vld [vmem:[%s248 + $0x14] sm:$0xf]
        %v256 = vld [vmem:[%s248 + $0x18] sm:$0xf]
        %v257 = vld [vmem:[%s248 + $0x1c] sm:$0xf]
        %v258 = vld [vmem:[%s248 + $0x20] sm:$0xf]
        %v259 = vld [vmem:[%s248 + $0x24] sm:$0xf]
        %v260 = vld [vmem:[%s248 + $0x28] sm:$0xf]
        %v261 = vld [vmem:[%s248 + $0x2c] sm:$0xf]
        %v262 = vld [vmem:[%s248 + $0x30] sm:$0xf]
        %v263 = vld [vmem:[%s248 + $0x34] sm:$0xf]
        %v264 = vld [vmem:[%s248 + $0x38] sm:$0xf]
        %v265 = vld [vmem:[%s248 + $0x3c] sm:$0xf]
        %v266 = vld [vmem:[%s248 + $0x40] sm:$0xf]
        %v267 = vld [vmem:[%s248 + $0x44] sm:$0xf]
        %v268 = vld [vmem:[%s248 + $0x48] sm:$0xf]
        %v269 = vld [vmem:[%s248 + $0x4c] sm:$0xf]
        %v270 = vld [vmem:[%s248 + $0x50] sm:$0xf]
        %v271 = vld [vmem:[%s248 + $0x54] sm:$0xf]
        %v272 = vld [vmem:[%s248 + $0x58] sm:$0xf]
        %v273 = vld [vmem:[%s248 + $0x5c] sm:$0xf]
        %v274 = vld [vmem:[%s248 + $0x60] sm:$0xf]
        %v275 = vld [vmem:[%s248 + $0x64] sm:$0xf]
        %v276 = vld [vmem:[%s248 + $0x68] sm:$0xf]
        %v277 = vld [vmem:[%s248 + $0x6c] sm:$0xf]
        %v278 = vld [vmem:[%s248 + $0x70] sm:$0xf]
        %v279 = vld [vmem:[%s248 + $0x74] sm:$0xf]
        %v280 = vld [vmem:[%s248 + $0x78] sm:$0xf]
        %v281 = vld [vmem:[%s248 + $0x7c] sm:$0xf]
        %v282 = vld [vmem:[%s248 + $0x80] sm:$0xf]
        %v283 = vld [vmem:[%s248 + $0x84] sm:$0xf]
        %v284 = vld [vmem:[%s248 + $0x88] sm:$0xf]
        %v285 = vld [vmem:[%s248 + $0x8c] sm:$0xf]
        %v286 = vld [vmem:[%s248 + $0x90] sm:$0xf]
        %v287 = vld [vmem:[%s248 + $0x94] sm:$0xf]
        %v288 = vld [vmem:[%s248 + $0x98] sm:$0xf]
        %v289 = vld [vmem:[%s248 + $0x9c] sm:$0xf]
        %v290 = vld [vmem:[%s248 + $0xa0] sm:$0xf]
        %v291 = vld [vmem:[%s248 + $0xa4] sm:$0xf]
        %v292 = vld [vmem:[%s248 + $0xa8] sm:$0xf]
        %v293 = vld [vmem:[%s248 + $0xac] sm:$0xf]
        %v294 = vld [vmem:[%s248 + $0xb0] sm:$0xf]
        %v295 = vld [vmem:[%s248 + $0xb4] sm:$0xf]
        %v296 = vld [vmem:[%s248 + $0xb8] sm:$0xf]
        %v297 = vld [vmem:[%s248 + $0xbc] sm:$0xf]
        %v298 = vld [vmem:[%s248 + $0xc0] sm:$0x1]
        %v299 = vld [vmem:[%s248] sm:$0xe]
        %v300 = vld [vmem:[%s248 + $0xc0] sm:$0xf]
        %v301 = vld [vmem:[%s248 + $0xc4] sm:$0xf]
        %v302 = vld [vmem:[%s248 + $0xc8] sm:$0xf]
        %v303 = vld [vmem:[%s248 + $0xcc] sm:$0x1]
        %v304 = vld [vmem:[%s248 + $0xc] sm:$0xe]
        %v305 = vld [vmem:[%s248 + $0xcc] sm:$0xf]
        %v306 = vld [vmem:[%s248 + $0xd0] sm:$0xf]
        %v307 = vld [vmem:[%s248 + $0xd4] sm:$0xf]
        %v308 = vld [vmem:[%s248 + $0xd8] sm:$0x1]
        %v309 = vld [vmem:[%s248 + $0x18] sm:$0xe]
        %v358 = vunpack.c.l.b16 %v250
        %v359 = vunpack.c.l.b16 %v251
        %v360 = vunpack.c.l.b16 %v252
        %v361 = vunpack.c.l.b16 %v253
        %v362 = vunpack.c.l.b16 %v254
        %v363 = vunpack.c.l.b16 %v255
        %v364 = vunpack.c.l.b16 %v256
        %v365 = vunpack.c.l.b16 %v257
        %v366 = vunpack.c.l.b16 %v258
        %v367 = vunpack.c.l.b16 %v259
        %v368 = vunpack.c.l.b16 %v260
        %v369 = vunpack.c.l.b16 %v261
        %v370 = vunpack.c.l.b16 %v262
        %v371 = vunpack.c.l.b16 %v263
        %v372 = vunpack.c.l.b16 %v264
        %v373 = vunpack.c.l.b16 %v265
        %v374 = vunpack.c.l.b16 %v266
        %v375 = vunpack.c.l.b16 %v267
        %v376 = vunpack.c.l.b16 %v268
        %v377 = vunpack.c.l.b16 %v269
        %v378 = vunpack.c.l.b16 %v270
        %v379 = vunpack.c.l.b16 %v271
        %v380 = vunpack.c.l.b16 %v272
        %v381 = vunpack.c.l.b16 %v273
        %v382 = vunpack.c.l.b16 %v274
        %v383 = vunpack.c.l.b16 %v275
        %v384 = vunpack.c.l.b16 %v276
        %v385 = vunpack.c.l.b16 %v277
        %v386 = vunpack.c.l.b16 %v278
        %v387 = vunpack.c.l.b16 %v279
        %v388 = vunpack.c.l.b16 %v280
        %v389 = vunpack.c.l.b16 %v281
        %v390 = vunpack.c.l.b16 %v282
        %v391 = vunpack.c.l.b16 %v283
        %v392 = vunpack.c.l.b16 %v284
        %v393 = vunpack.c.l.b16 %v285
        %v394 = vunpack.c.l.b16 %v286
        %v395 = vunpack.c.l.b16 %v287
        %v396 = vunpack.c.l.b16 %v288
        %v397 = vunpack.c.l.b16 %v289
        %v398 = vunpack.c.l.b16 %v290
        %v399 = vunpack.c.l.b16 %v291
        %v400 = vunpack.c.l.b16 %v292
        %v401 = vunpack.c.l.b16 %v293
        %v402 = vunpack.c.l.b16 %v294
        %v403 = vunpack.c.l.b16 %v295
        %v404 = vunpack.c.l.b16 %v296
        %v405 = vunpack.c.l.b16 %v297
        %v406 = vpack.c.b16 %v359, %v358
        %v407 = vpack.c.b16 %v361, %v360
        %v408 = vpack.c.b16 %v363, %v362
        %v409 = vpack.c.b16 %v365, %v364
        %v410 = vpack.c.b16 %v367, %v366
        %v411 = vpack.c.b16 %v369, %v368
        %v412 = vpack.c.b16 %v371, %v370
        %v413 = vpack.c.b16 %v373, %v372
        %v414 = vpack.c.b16 %v375, %v374
        %v415 = vpack.c.b16 %v377, %v376
        %v416 = vpack.c.b16 %v379, %v378
        %v417 = vpack.c.b16 %v381, %v380
        %v418 = vpack.c.b16 %v383, %v382
        %v419 = vpack.c.b16 %v385, %v384
        %v420 = vpack.c.b16 %v387, %v386
        %v421 = vpack.c.b16 %v389, %v388
        %v422 = vpack.c.b16 %v391, %v390
        %v423 = vpack.c.b16 %v393, %v392
        %v424 = vpack.c.b16 %v395, %v394
        %v425 = vpack.c.b16 %v397, %v396
        %v426 = vpack.c.b16 %v399, %v398
        %v427 = vpack.c.b16 %v401, %v400
        %v428 = vpack.c.b16 %v403, %v402
        %v429 = vpack.c.b16 %v405, %v404
        %v431 = vunpack.c.l.b16 %v298
        %v432 = vpack.c.b16 %v431, %v431
        %vm433 = vsmask.f32 7424
        %v435 = vshrl.u32 %v406, 16
        %v437 = vshll.u32 %v406, 16
        %v439 = vrot.slane %v437, 1
        %v440 = vor.u32 %v435, %v439
        %v442 = vshll.u32 %v407, 16
        %v444 = vrot.slane %v442, 1
        %v445 = vsel %vm433, %v440, %v444
        %v446 = vshrl.u32 %v407, 16
        %v448 = vor.u32 %v446, %v444
        %v450 = vshll.u32 %v408, 16
        %v452 = vrot.slane %v450, 1
        %v453 = vsel %vm433, %v448, %v452
        %v454 = vshrl.u32 %v408, 16
        %v456 = vor.u32 %v454, %v452
        %v458 = vshll.u32 %v409, 16
        %v460 = vrot.slane %v458, 1
        %v461 = vsel %vm433, %v456, %v460
        %v462 = vshrl.u32 %v409, 16
        %v464 = vor.u32 %v462, %v460
        %v466 = vshll.u32 %v410, 16
        %v468 = vrot.slane %v466, 1
        %v469 = vsel %vm433, %v464, %v468
        %v470 = vshrl.u32 %v410, 16
        %v472 = vor.u32 %v470, %v468
        %v474 = vshll.u32 %v411, 16
        %v476 = vrot.slane %v474, 1
        %v477 = vsel %vm433, %v472, %v476
        %v478 = vshrl.u32 %v411, 16
        %v480 = vor.u32 %v478, %v476
        %v482 = vshll.u32 %v412, 16
        %v484 = vrot.slane %v482, 1
        %v485 = vsel %vm433, %v480, %v484
        %v486 = vshrl.u32 %v412, 16
        %v488 = vor.u32 %v486, %v484
        %v490 = vshll.u32 %v413, 16
        %v492 = vrot.slane %v490, 1
        %v493 = vsel %vm433, %v488, %v492
        %v494 = vshrl.u32 %v413, 16
        %v496 = vor.u32 %v494, %v492
        %v498 = vshll.u32 %v414, 16
        %v500 = vrot.slane %v498, 1
        %v501 = vsel %vm433, %v496, %v500
        %v502 = vshrl.u32 %v414, 16
        %v504 = vor.u32 %v502, %v500
        %v506 = vshll.u32 %v415, 16
        %v508 = vrot.slane %v506, 1
        %v509 = vsel %vm433, %v504, %v508
        %v510 = vshrl.u32 %v415, 16
        %v512 = vor.u32 %v510, %v508
        %v514 = vshll.u32 %v416, 16
        %v516 = vrot.slane %v514, 1
        %v517 = vsel %vm433, %v512, %v516
        %v518 = vshrl.u32 %v416, 16
        %v520 = vor.u32 %v518, %v516
        %v522 = vshll.u32 %v417, 16
        %v524 = vrot.slane %v522, 1
        %v525 = vsel %vm433, %v520, %v524
        %v526 = vshrl.u32 %v417, 16
        %v528 = vor.u32 %v526, %v524
        %v530 = vshll.u32 %v418, 16
        %v532 = vrot.slane %v530, 1
        %v533 = vsel %vm433, %v528, %v532
        %v534 = vshrl.u32 %v418, 16
        %v536 = vor.u32 %v534, %v532
        %v538 = vshll.u32 %v419, 16
        %v540 = vrot.slane %v538, 1
        %v541 = vsel %vm433, %v536, %v540
        %v542 = vshrl.u32 %v419, 16
        %v544 = vor.u32 %v542, %v540
        %v546 = vshll.u32 %v420, 16
        %v548 = vrot.slane %v546, 1
        %v549 = vsel %vm433, %v544, %v548
        %v550 = vshrl.u32 %v420, 16
        %v552 = vor.u32 %v550, %v548
        %v554 = vshll.u32 %v421, 16
        %v556 = vrot.slane %v554, 1
        %v557 = vsel %vm433, %v552, %v556
        %v558 = vshrl.u32 %v421, 16
        %v560 = vor.u32 %v558, %v556
        %v562 = vshll.u32 %v422, 16
        %v564 = vrot.slane %v562, 1
        %v565 = vsel %vm433, %v560, %v564
        %v566 = vshrl.u32 %v422, 16
        %v568 = vor.u32 %v566, %v564
        %v570 = vshll.u32 %v423, 16
        %v572 = vrot.slane %v570, 1
        %v573 = vsel %vm433, %v568, %v572
        %v574 = vshrl.u32 %v423, 16
        %v576 = vor.u32 %v574, %v572
        %v578 = vshll.u32 %v424, 16
        %v580 = vrot.slane %v578, 1
        %v581 = vsel %vm433, %v576, %v580
        %v582 = vshrl.u32 %v424, 16
        %v584 = vor.u32 %v582, %v580
        %v586 = vshll.u32 %v425, 16
        %v588 = vrot.slane %v586, 1
        %v589 = vsel %vm433, %v584, %v588
        %v590 = vshrl.u32 %v425, 16
        %v592 = vor.u32 %v590, %v588
        %v594 = vshll.u32 %v426, 16
        %v596 = vrot.slane %v594, 1
        %v597 = vsel %vm433, %v592, %v596
        %v598 = vshrl.u32 %v426, 16
        %v600 = vor.u32 %v598, %v596
        %v602 = vshll.u32 %v427, 16
        %v604 = vrot.slane %v602, 1
        %v605 = vsel %vm433, %v600, %v604
        %v606 = vshrl.u32 %v427, 16
        %v608 = vor.u32 %v606, %v604
        %v610 = vshll.u32 %v428, 16
        %v612 = vrot.slane %v610, 1
        %v613 = vsel %vm433, %v608, %v612
        %v614 = vshrl.u32 %v428, 16
        %v616 = vor.u32 %v614, %v612
        %v618 = vshll.u32 %v429, 16
        %v620 = vrot.slane %v618, 1
        %v621 = vsel %vm433, %v616, %v620
        %v622 = vshrl.u32 %v429, 16
        %v624 = vor.u32 %v622, %v620
        %v626 = vshll.u32 %v432, 16
        %v628 = vrot.slane %v626, 1
        %v629 = vsel %vm433, %v624, %v628
        %630 = vrot.lane.b32.xlu0 %v445, 4
        %v631 = vpop.permute.xlu0 %630
        %632 = vrot.lane.b32.xlu0 %v453, 4
        %v633 = vpop.permute.xlu0 %632
        %634 = vrot.lane.b32.xlu0 %v461, 4
        %v635 = vpop.permute.xlu0 %634
        %636 = vrot.lane.b32.xlu0 %v469, 4
        %v637 = vpop.permute.xlu0 %636
        %638 = vrot.lane.b32.xlu0 %v477, 4
        %v639 = vpop.permute.xlu0 %638
        %640 = vrot.lane.b32.xlu0 %v485, 4
        %v641 = vpop.permute.xlu0 %640
        %642 = vrot.lane.b32.xlu0 %v493, 4
        %v643 = vpop.permute.xlu0 %642
        %644 = vrot.lane.b32.xlu0 %v501, 4
        %v645 = vpop.permute.xlu0 %644
        %646 = vrot.lane.b32.xlu0 %v509, 4
        %v647 = vpop.permute.xlu0 %646
        %648 = vrot.lane.b32.xlu0 %v517, 4
        %v649 = vpop.permute.xlu0 %648
        %650 = vrot.lane.b32.xlu0 %v525, 4
        %v651 = vpop.permute.xlu0 %650
        %652 = vrot.lane.b32.xlu0 %v533, 4
        %v653 = vpop.permute.xlu0 %652
        %654 = vrot.lane.b32.xlu0 %v541, 4
        %v655 = vpop.permute.xlu0 %654
        %656 = vrot.lane.b32.xlu0 %v549, 4
        %v657 = vpop.permute.xlu0 %656
        %658 = vrot.lane.b32.xlu0 %v557, 4
        %v659 = vpop.permute.xlu0 %658
        %660 = vrot.lane.b32.xlu0 %v565, 4
        %v661 = vpop.permute.xlu0 %660
        %662 = vrot.lane.b32.xlu0 %v573, 4
        %v663 = vpop.permute.xlu0 %662
        %664 = vrot.lane.b32.xlu0 %v581, 4
        %v665 = vpop.permute.xlu0 %664
        %666 = vrot.lane.b32.xlu0 %v589, 4
        %v667 = vpop.permute.xlu0 %666
        %668 = vrot.lane.b32.xlu0 %v597, 4
        %v669 = vpop.permute.xlu0 %668
        %670 = vrot.lane.b32.xlu0 %v605, 4
        %v671 = vpop.permute.xlu0 %670
        %672 = vrot.lane.b32.xlu0 %v613, 4
        %v673 = vpop.permute.xlu0 %672
        %674 = vrot.lane.b32.xlu0 %v621, 4
        %v675 = vpop.permute.xlu0 %674
        %676 = vrot.lane.b32.xlu0 %v629, 4
        %v677 = vpop.permute.xlu0 %676
        %v679 = vunpack.c.l.b16 %v299
        %v680 = vpack.c.b16 %v359, %v679
        %vm681 = vcmask 1046528
        %v682 = vrot.slane %v680, 1
        %v683 = vrot.slane %v407, 1
        %v684 = vsel %vm681, %v682, %v683
        %v685 = vrot.slane %v408, 1
        %v686 = vsel %vm681, %v683, %v685
        %v687 = vrot.slane %v409, 1
        %v688 = vsel %vm681, %v685, %v687
        %v689 = vrot.slane %v410, 1
        %v690 = vsel %vm681, %v687, %v689
        %v691 = vrot.slane %v411, 1
        %v692 = vsel %vm681, %v689, %v691
        %v693 = vrot.slane %v412, 1
        %v694 = vsel %vm681, %v691, %v693
        %v695 = vrot.slane %v413, 1
        %v696 = vsel %vm681, %v693, %v695
        %v697 = vrot.slane %v414, 1
        %v698 = vsel %vm681, %v695, %v697
        %v699 = vrot.slane %v415, 1
        %v700 = vsel %vm681, %v697, %v699
        %v701 = vrot.slane %v416, 1
        %v702 = vsel %vm681, %v699, %v701
        %v703 = vrot.slane %v417, 1
        %v704 = vsel %vm681, %v701, %v703
        %v705 = vrot.slane %v418, 1
        %v706 = vsel %vm681, %v703, %v705
        %v707 = vrot.slane %v419, 1
        %v708 = vsel %vm681, %v705, %v707
        %v709 = vrot.slane %v420, 1
        %v710 = vsel %vm681, %v707, %v709
        %v711 = vrot.slane %v421, 1
        %v712 = vsel %vm681, %v709, %v711
        %v713 = vrot.slane %v422, 1
        %v714 = vsel %vm681, %v711, %v713
        %v715 = vrot.slane %v423, 1
        %v716 = vsel %vm681, %v713, %v715
        %v717 = vrot.slane %v424, 1
        %v718 = vsel %vm681, %v715, %v717
        %v719 = vrot.slane %v425, 1
        %v720 = vsel %vm681, %v717, %v719
        %v721 = vrot.slane %v426, 1
        %v722 = vsel %vm681, %v719, %v721
        %v723 = vrot.slane %v427, 1
        %v724 = vsel %vm681, %v721, %v723
        %v725 = vrot.slane %v428, 1
        %v726 = vsel %vm681, %v723, %v725
        %v727 = vrot.slane %v429, 1
        %v728 = vsel %vm681, %v725, %v727
        %v729 = vrot.slane %v432, 1
        %v730 = vsel %vm681, %v727, %v729
        %731 = vrot.lane.b32.xlu0 %v684, 8
        %v732 = vpop.permute.xlu0 %731
        %733 = vrot.lane.b32.xlu0 %v686, 8
        %v734 = vpop.permute.xlu0 %733
        %735 = vrot.lane.b32.xlu0 %v688, 8
        %v736 = vpop.permute.xlu0 %735
        %737 = vrot.lane.b32.xlu0 %v690, 8
        %v738 = vpop.permute.xlu0 %737
        %739 = vrot.lane.b32.xlu0 %v692, 8
        %v740 = vpop.permute.xlu0 %739
        %741 = vrot.lane.b32.xlu0 %v694, 8
        %v742 = vpop.permute.xlu0 %741
        %743 = vrot.lane.b32.xlu0 %v696, 8
        %v744 = vpop.permute.xlu0 %743
        %745 = vrot.lane.b32.xlu0 %v698, 8
        %v746 = vpop.permute.xlu0 %745
        %747 = vrot.lane.b32.xlu0 %v700, 8
        %v748 = vpop.permute.xlu0 %747
        %749 = vrot.lane.b32.xlu0 %v702, 8
        %v750 = vpop.permute.xlu0 %749
        %751 = vrot.lane.b32.xlu0 %v704, 8
        %v752 = vpop.permute.xlu0 %751
        %753 = vrot.lane.b32.xlu0 %v706, 8
        %v754 = vpop.permute.xlu0 %753
        %755 = vrot.lane.b32.xlu0 %v708, 8
        %v756 = vpop.permute.xlu0 %755
        %757 = vrot.lane.b32.xlu0 %v710, 8
        %v758 = vpop.permute.xlu0 %757
        %759 = vrot.lane.b32.xlu0 %v712, 8
        %v760 = vpop.permute.xlu0 %759
        %761 = vrot.lane.b32.xlu0 %v714, 8
        %v762 = vpop.permute.xlu0 %761
        %763 = vrot.lane.b32.xlu0 %v716, 8
        %v764 = vpop.permute.xlu0 %763
        %765 = vrot.lane.b32.xlu0 %v718, 8
        %v766 = vpop.permute.xlu0 %765
        %767 = vrot.lane.b32.xlu0 %v720, 8
        %v768 = vpop.permute.xlu0 %767
        %769 = vrot.lane.b32.xlu0 %v722, 8
        %v770 = vpop.permute.xlu0 %769
        %771 = vrot.lane.b32.xlu0 %v724, 8
        %v772 = vpop.permute.xlu0 %771
        %773 = vrot.lane.b32.xlu0 %v726, 8
        %v774 = vpop.permute.xlu0 %773
        %775 = vrot.lane.b32.xlu0 %v728, 8
        %v776 = vpop.permute.xlu0 %775
        %777 = vrot.lane.b32.xlu0 %v730, 8
        %v778 = vpop.permute.xlu0 %777
        %v782 = vunpack.c.l.b16 %v300
        %v783 = vunpack.c.l.b16 %v301
        %v784 = vunpack.c.l.b16 %v302
        %v785 = vpack.c.b16 %v362, %v361
        %v786 = vpack.c.b16 %v364, %v363
        %v787 = vpack.c.b16 %v366, %v365
        %v788 = vpack.c.b16 %v368, %v367
        %v789 = vpack.c.b16 %v370, %v369
        %v790 = vpack.c.b16 %v372, %v371
        %v791 = vpack.c.b16 %v374, %v373
        %v792 = vpack.c.b16 %v376, %v375
        %v793 = vpack.c.b16 %v378, %v377
        %v794 = vpack.c.b16 %v380, %v379
        %v795 = vpack.c.b16 %v382, %v381
        %v796 = vpack.c.b16 %v384, %v383
        %v797 = vpack.c.b16 %v386, %v385
        %v798 = vpack.c.b16 %v388, %v387
        %v799 = vpack.c.b16 %v390, %v389
        %v800 = vpack.c.b16 %v392, %v391
        %v801 = vpack.c.b16 %v394, %v393
        %v802 = vpack.c.b16 %v396, %v395
        %v803 = vpack.c.b16 %v398, %v397
        %v804 = vpack.c.b16 %v400, %v399
        %v805 = vpack.c.b16 %v402, %v401
        %v806 = vpack.c.b16 %v404, %v403
        %v807 = vpack.c.b16 %v782, %v405
        %v808 = vpack.c.b16 %v784, %v783
        %809 = vrot.lane.b32.xlu0 %v785, 12
        %v810 = vpop.permute.xlu0 %809
        %811 = vrot.lane.b32.xlu0 %v786, 12
        %v812 = vpop.permute.xlu0 %811
        %813 = vrot.lane.b32.xlu0 %v787, 12
        %v814 = vpop.permute.xlu0 %813
        %815 = vrot.lane.b32.xlu0 %v788, 12
        %v816 = vpop.permute.xlu0 %815
        %817 = vrot.lane.b32.xlu0 %v789, 12
        %v818 = vpop.permute.xlu0 %817
        %819 = vrot.lane.b32.xlu0 %v790, 12
        %v820 = vpop.permute.xlu0 %819
        %821 = vrot.lane.b32.xlu0 %v791, 12
        %v822 = vpop.permute.xlu0 %821
        %823 = vrot.lane.b32.xlu0 %v792, 12
        %v824 = vpop.permute.xlu0 %823
        %825 = vrot.lane.b32.xlu0 %v793, 12
        %v826 = vpop.permute.xlu0 %825
        %827 = vrot.lane.b32.xlu0 %v794, 12
        %v828 = vpop.permute.xlu0 %827
        %829 = vrot.lane.b32.xlu0 %v795, 12
        %v830 = vpop.permute.xlu0 %829
        %831 = vrot.lane.b32.xlu0 %v796, 12
        %v832 = vpop.permute.xlu0 %831
        %833 = vrot.lane.b32.xlu0 %v797, 12
        %v834 = vpop.permute.xlu0 %833
        %835 = vrot.lane.b32.xlu0 %v798, 12
        %v836 = vpop.permute.xlu0 %835
        %837 = vrot.lane.b32.xlu0 %v799, 12
        %v838 = vpop.permute.xlu0 %837
        %839 = vrot.lane.b32.xlu0 %v800, 12
        %v840 = vpop.permute.xlu0 %839
        %841 = vrot.lane.b32.xlu0 %v801, 12
        %v842 = vpop.permute.xlu0 %841
        %843 = vrot.lane.b32.xlu0 %v802, 12
        %v844 = vpop.permute.xlu0 %843
        %845 = vrot.lane.b32.xlu0 %v803, 12
        %v846 = vpop.permute.xlu0 %845
        %847 = vrot.lane.b32.xlu0 %v804, 12
        %v848 = vpop.permute.xlu0 %847
        %849 = vrot.lane.b32.xlu0 %v805, 12
        %v850 = vpop.permute.xlu0 %849
        %851 = vrot.lane.b32.xlu0 %v806, 12
        %v852 = vpop.permute.xlu0 %851
        %853 = vrot.lane.b32.xlu0 %v807, 12
        %v854 = vpop.permute.xlu0 %853
        %855 = vrot.lane.b32.xlu0 %v808, 12
        %v856 = vpop.permute.xlu0 %855
        %v858 = vunpack.c.l.b16 %v303
        %v859 = vpack.c.b16 %v858, %v858
        %v861 = vshrl.u32 %v785, 16
        %v863 = vshll.u32 %v785, 16
        %v865 = vrot.slane %v863, 1
        %v866 = vor.u32 %v861, %v865
        %v868 = vshll.u32 %v786, 16
        %v870 = vrot.slane %v868, 1
        %v871 = vsel %vm433, %v866, %v870
        %v872 = vshrl.u32 %v786, 16
        %v874 = vor.u32 %v872, %v870
        %v876 = vshll.u32 %v787, 16
        %v878 = vrot.slane %v876, 1
        %v879 = vsel %vm433, %v874, %v878
        %v880 = vshrl.u32 %v787, 16
        %v882 = vor.u32 %v880, %v878
        %v884 = vshll.u32 %v788, 16
        %v886 = vrot.slane %v884, 1
        %v887 = vsel %vm433, %v882, %v886
        %v888 = vshrl.u32 %v788, 16
        %v890 = vor.u32 %v888, %v886
        %v892 = vshll.u32 %v789, 16
        %v894 = vrot.slane %v892, 1
        %v895 = vsel %vm433, %v890, %v894
        %v896 = vshrl.u32 %v789, 16
        %v898 = vor.u32 %v896, %v894
        %v900 = vshll.u32 %v790, 16
        %v902 = vrot.slane %v900, 1
        %v903 = vsel %vm433, %v898, %v902
        %v904 = vshrl.u32 %v790, 16
        %v906 = vor.u32 %v904, %v902
        %v908 = vshll.u32 %v791, 16
        %v910 = vrot.slane %v908, 1
        %v911 = vsel %vm433, %v906, %v910
        %v912 = vshrl.u32 %v791, 16
        %v914 = vor.u32 %v912, %v910
        %v916 = vshll.u32 %v792, 16
        %v918 = vrot.slane %v916, 1
        %v919 = vsel %vm433, %v914, %v918
        %v920 = vshrl.u32 %v792, 16
        %v922 = vor.u32 %v920, %v918
        %v924 = vshll.u32 %v793, 16
        %v926 = vrot.slane %v924, 1
        %v927 = vsel %vm433, %v922, %v926
        %v928 = vshrl.u32 %v793, 16
        %v930 = vor.u32 %v928, %v926
        %v932 = vshll.u32 %v794, 16
        %v934 = vrot.slane %v932, 1
        %v935 = vsel %vm433, %v930, %v934
        %v936 = vshrl.u32 %v794, 16
        %v938 = vor.u32 %v936, %v934
        %v940 = vshll.u32 %v795, 16
        %v942 = vrot.slane %v940, 1
        %v943 = vsel %vm433, %v938, %v942
        %v944 = vshrl.u32 %v795, 16
        %v946 = vor.u32 %v944, %v942
        %v948 = vshll.u32 %v796, 16
        %v950 = vrot.slane %v948, 1
        %v951 = vsel %vm433, %v946, %v950
        %v952 = vshrl.u32 %v796, 16
        %v954 = vor.u32 %v952, %v950
        %v956 = vshll.u32 %v797, 16
        %v958 = vrot.slane %v956, 1
        %v959 = vsel %vm433, %v954, %v958
        %v960 = vshrl.u32 %v797, 16
        %v962 = vor.u32 %v960, %v958
        %v964 = vshll.u32 %v798, 16
        %v966 = vrot.slane %v964, 1
        %v967 = vsel %vm433, %v962, %v966
        %v968 = vshrl.u32 %v798, 16
        %v970 = vor.u32 %v968, %v966
        %v972 = vshll.u32 %v799, 16
        %v974 = vrot.slane %v972, 1
        %v975 = vsel %vm433, %v970, %v974
        %v976 = vshrl.u32 %v799, 16
        %v978 = vor.u32 %v976, %v974
        %v980 = vshll.u32 %v800, 16
        %v982 = vrot.slane %v980, 1
        %v983 = vsel %vm433, %v978, %v982
        %v984 = vshrl.u32 %v800, 16
        %v986 = vor.u32 %v984, %v982
        %v988 = vshll.u32 %v801, 16
        %v990 = vrot.slane %v988, 1
        %v991 = vsel %vm433, %v986, %v990
        %v992 = vshrl.u32 %v801, 16
        %v994 = vor.u32 %v992, %v990
        %v996 = vshll.u32 %v802, 16
        %v998 = vrot.slane %v996, 1
        %v999 = vsel %vm433, %v994, %v998
        %v1000 = vshrl.u32 %v802, 16
        %v1002 = vor.u32 %v1000, %v998
        %v1004 = vshll.u32 %v803, 16
        %v1006 = vrot.slane %v1004, 1
        %v1007 = vsel %vm433, %v1002, %v1006
        %v1008 = vshrl.u32 %v803, 16
        %v1010 = vor.u32 %v1008, %v1006
        %v1012 = vshll.u32 %v804, 16
        %v1014 = vrot.slane %v1012, 1
        %v1015 = vsel %vm433, %v1010, %v1014
        %v1016 = vshrl.u32 %v804, 16
        %v1018 = vor.u32 %v1016, %v1014
        %v1020 = vshll.u32 %v805, 16
        %v1022 = vrot.slane %v1020, 1
        %v1023 = vsel %vm433, %v1018, %v1022
        %v1024 = vshrl.u32 %v805, 16
        %v1026 = vor.u32 %v1024, %v1022
        %v1028 = vshll.u32 %v806, 16
        %v1030 = vrot.slane %v1028, 1
        %v1031 = vsel %vm433, %v1026, %v1030
        %v1032 = vshrl.u32 %v806, 16
        %v1034 = vor.u32 %v1032, %v1030
        %v1036 = vshll.u32 %v807, 16
        %v1038 = vrot.slane %v1036, 1
        %v1039 = vsel %vm433, %v1034, %v1038
        %v1040 = vshrl.u32 %v807, 16
        %v1042 = vor.u32 %v1040, %v1038
        %v1044 = vshll.u32 %v808, 16
        %v1046 = vrot.slane %v1044, 1
        %v1047 = vsel %vm433, %v1042, %v1046
        %v1048 = vshrl.u32 %v808, 16
        %v1050 = vor.u32 %v1048, %v1046
        %v1052 = vshll.u32 %v859, 16
        %v1054 = vrot.slane %v1052, 1
        %v1055 = vsel %vm433, %v1050, %v1054
        %1056 = vrot.lane.b32.xlu0 %v871, 16
        %v1057 = vpop.permute.xlu0 %1056
        %1058 = vrot.lane.b32.xlu0 %v879, 16
        %v1059 = vpop.permute.xlu0 %1058
        %1060 = vrot.lane.b32.xlu0 %v887, 16
        %v1061 = vpop.permute.xlu0 %1060
        %1062 = vrot.lane.b32.xlu0 %v895, 16
        %v1063 = vpop.permute.xlu0 %1062
        %1064 = vrot.lane.b32.xlu0 %v903, 16
        %v1065 = vpop.permute.xlu0 %1064
        %1066 = vrot.lane.b32.xlu0 %v911, 16
        %v1067 = vpop.permute.xlu0 %1066
        %1068 = vrot.lane.b32.xlu0 %v919, 16
        %v1069 = vpop.permute.xlu0 %1068
        %1070 = vrot.lane.b32.xlu0 %v927, 16
        %v1071 = vpop.permute.xlu0 %1070
        %1072 = vrot.lane.b32.xlu0 %v935, 16
        %v1073 = vpop.permute.xlu0 %1072
        %1074 = vrot.lane.b32.xlu0 %v943, 16
        %v1075 = vpop.permute.xlu0 %1074
        %1076 = vrot.lane.b32.xlu0 %v951, 16
        %v1077 = vpop.permute.xlu0 %1076
        %1078 = vrot.lane.b32.xlu0 %v959, 16
        %v1079 = vpop.permute.xlu0 %1078
        %1080 = vrot.lane.b32.xlu0 %v967, 16
        %v1081 = vpop.permute.xlu0 %1080
        %1082 = vrot.lane.b32.xlu0 %v975, 16
        %v1083 = vpop.permute.xlu0 %1082
        %1084 = vrot.lane.b32.xlu0 %v983, 16
        %v1085 = vpop.permute.xlu0 %1084
        %1086 = vrot.lane.b32.xlu0 %v991, 16
        %v1087 = vpop.permute.xlu0 %1086
        %1088 = vrot.lane.b32.xlu0 %v999, 16
        %v1089 = vpop.permute.xlu0 %1088
        %1090 = vrot.lane.b32.xlu0 %v1007, 16
        %v1091 = vpop.permute.xlu0 %1090
        %1092 = vrot.lane.b32.xlu0 %v1015, 16
        %v1093 = vpop.permute.xlu0 %1092
        %1094 = vrot.lane.b32.xlu0 %v1023, 16
        %v1095 = vpop.permute.xlu0 %1094
        %1096 = vrot.lane.b32.xlu0 %v1031, 16
        %v1097 = vpop.permute.xlu0 %1096
        %1098 = vrot.lane.b32.xlu0 %v1039, 16
        %v1099 = vpop.permute.xlu0 %1098
        %1100 = vrot.lane.b32.xlu0 %v1047, 16
        %v1101 = vpop.permute.xlu0 %1100
        %1102 = vrot.lane.b32.xlu0 %v1055, 16
        %v1103 = vpop.permute.xlu0 %1102
        %v1105 = vunpack.c.l.b16 %v304
        %v1106 = vpack.c.b16 %v362, %v1105
        %v1107 = vrot.slane %v1106, 1
        %v1108 = vrot.slane %v786, 1
        %v1109 = vsel %vm681, %v1107, %v1108
        %v1110 = vrot.slane %v787, 1
        %v1111 = vsel %vm681, %v1108, %v1110
        %v1112 = vrot.slane %v788, 1
        %v1113 = vsel %vm681, %v1110, %v1112
        %v1114 = vrot.slane %v789, 1
        %v1115 = vsel %vm681, %v1112, %v1114
        %v1116 = vrot.slane %v790, 1
        %v1117 = vsel %vm681, %v1114, %v1116
        %v1118 = vrot.slane %v791, 1
        %v1119 = vsel %vm681, %v1116, %v1118
        %v1120 = vrot.slane %v792, 1
        %v1121 = vsel %vm681, %v1118, %v1120
        %v1122 = vrot.slane %v793, 1
        %v1123 = vsel %vm681, %v1120, %v1122
        %v1124 = vrot.slane %v794, 1
        %v1125 = vsel %vm681, %v1122, %v1124
        %v1126 = vrot.slane %v795, 1
        %v1127 = vsel %vm681, %v1124, %v1126
        %v1128 = vrot.slane %v796, 1
        %v1129 = vsel %vm681, %v1126, %v1128
        %v1130 = vrot.slane %v797, 1
        %v1131 = vsel %vm681, %v1128, %v1130
        %v1132 = vrot.slane %v798, 1
        %v1133 = vsel %vm681, %v1130, %v1132
        %v1134 = vrot.slane %v799, 1
        %v1135 = vsel %vm681, %v1132, %v1134
        %v1136 = vrot.slane %v800, 1
        %v1137 = vsel %vm681, %v1134, %v1136
        %v1138 = vrot.slane %v801, 1
        %v1139 = vsel %vm681, %v1136, %v1138
        %v1140 = vrot.slane %v802, 1
        %v1141 = vsel %vm681, %v1138, %v1140
        %v1142 = vrot.slane %v803, 1
        %v1143 = vsel %vm681, %v1140, %v1142
        %v1144 = vrot.slane %v804, 1
        %v1145 = vsel %vm681, %v1142, %v1144
        %v1146 = vrot.slane %v805, 1
        %v1147 = vsel %vm681, %v1144, %v1146
        %v1148 = vrot.slane %v806, 1
        %v1149 = vsel %vm681, %v1146, %v1148
        %v1150 = vrot.slane %v807, 1
        %v1151 = vsel %vm681, %v1148, %v1150
        %v1152 = vrot.slane %v808, 1
        %v1153 = vsel %vm681, %v1150, %v1152
        %v1154 = vrot.slane %v859, 1
        %v1155 = vsel %vm681, %v1152, %v1154
        %1156 = vrot.lane.b32.xlu0 %v1109, 20
        %v1157 = vpop.permute.xlu0 %1156
        %1158 = vrot.lane.b32.xlu0 %v1111, 20
        %v1159 = vpop.permute.xlu0 %1158
        %1160 = vrot.lane.b32.xlu0 %v1113, 20
        %v1161 = vpop.permute.xlu0 %1160
        %1162 = vrot.lane.b32.xlu0 %v1115, 20
        %v1163 = vpop.permute.xlu0 %1162
        %1164 = vrot.lane.b32.xlu0 %v1117, 20
        %v1165 = vpop.permute.xlu0 %1164
        %1166 = vrot.lane.b32.xlu0 %v1119, 20
        %v1167 = vpop.permute.xlu0 %1166
        %1168 = vrot.lane.b32.xlu0 %v1121, 20
        %v1169 = vpop.permute.xlu0 %1168
        %1170 = vrot.lane.b32.xlu0 %v1123, 20
        %v1171 = vpop.permute.xlu0 %1170
        %1172 = vrot.lane.b32.xlu0 %v1125, 20
        %v1173 = vpop.permute.xlu0 %1172
        %1174 = vrot.lane.b32.xlu0 %v1127, 20
        %v1175 = vpop.permute.xlu0 %1174
        %1176 = vrot.lane.b32.xlu0 %v1129, 20
        %v1177 = vpop.permute.xlu0 %1176
        %1178 = vrot.lane.b32.xlu0 %v1131, 20
        %v1179 = vpop.permute.xlu0 %1178
        %1180 = vrot.lane.b32.xlu0 %v1133, 20
        %v1181 = vpop.permute.xlu0 %1180
        %1182 = vrot.lane.b32.xlu0 %v1135, 20
        %v1183 = vpop.permute.xlu0 %1182
        %1184 = vrot.lane.b32.xlu0 %v1137, 20
        %v1185 = vpop.permute.xlu0 %1184
        %1186 = vrot.lane.b32.xlu0 %v1139, 20
        %v1187 = vpop.permute.xlu0 %1186
        %1188 = vrot.lane.b32.xlu0 %v1141, 20
        %v1189 = vpop.permute.xlu0 %1188
        %1190 = vrot.lane.b32.xlu0 %v1143, 20
        %v1191 = vpop.permute.xlu0 %1190
        %1192 = vrot.lane.b32.xlu0 %v1145, 20
        %v1193 = vpop.permute.xlu0 %1192
        %1194 = vrot.lane.b32.xlu0 %v1147, 20
        %v1195 = vpop.permute.xlu0 %1194
        %1196 = vrot.lane.b32.xlu0 %v1149, 20
        %v1197 = vpop.permute.xlu0 %1196
        %1198 = vrot.lane.b32.xlu0 %v1151, 20
        %v1199 = vpop.permute.xlu0 %1198
        %1200 = vrot.lane.b32.xlu0 %v1153, 20
        %v1201 = vpop.permute.xlu0 %1200
        %1202 = vrot.lane.b32.xlu0 %v1155, 20
        %v1203 = vpop.permute.xlu0 %1202
        %v1207 = vunpack.c.l.b16 %v305
        %v1208 = vunpack.c.l.b16 %v306
        %v1209 = vunpack.c.l.b16 %v307
        %v1210 = vpack.c.b16 %v783, %v782
        %v1211 = vpack.c.b16 %v1207, %v784
        %v1212 = vpack.c.b16 %v1209, %v1208
        %1213 = vrot.lane.b32.xlu0 %v409, 24
        %v1214 = vpop.permute.xlu0 %1213
        %1215 = vrot.lane.b32.xlu0 %v410, 24
        %v1216 = vpop.permute.xlu0 %1215
        %1217 = vrot.lane.b32.xlu0 %v411, 24
        %v1218 = vpop.permute.xlu0 %1217
        %1219 = vrot.lane.b32.xlu0 %v412, 24
        %v1220 = vpop.permute.xlu0 %1219
        %1221 = vrot.lane.b32.xlu0 %v413, 24
        %v1222 = vpop.permute.xlu0 %1221
        %1223 = vrot.lane.b32.xlu0 %v414, 24
        %v1224 = vpop.permute.xlu0 %1223
        %1225 = vrot.lane.b32.xlu0 %v415, 24
        %v1226 = vpop.permute.xlu0 %1225
        %1227 = vrot.lane.b32.xlu0 %v416, 24
        %v1228 = vpop.permute.xlu0 %1227
        %1229 = vrot.lane.b32.xlu0 %v417, 24
        %v1230 = vpop.permute.xlu0 %1229
        %1231 = vrot.lane.b32.xlu0 %v418, 24
        %v1232 = vpop.permute.xlu0 %1231
        %1233 = vrot.lane.b32.xlu0 %v419, 24
        %v1234 = vpop.permute.xlu0 %1233
        %1235 = vrot.lane.b32.xlu0 %v420, 24
        %v1236 = vpop.permute.xlu0 %1235
        %1237 = vrot.lane.b32.xlu0 %v421, 24
        %v1238 = vpop.permute.xlu0 %1237
        %1239 = vrot.lane.b32.xlu0 %v422, 24
        %v1240 = vpop.permute.xlu0 %1239
        %1241 = vrot.lane.b32.xlu0 %v423, 24
        %v1242 = vpop.permute.xlu0 %1241
        %1243 = vrot.lane.b32.xlu0 %v424, 24
        %v1244 = vpop.permute.xlu0 %1243
        %1245 = vrot.lane.b32.xlu0 %v425, 24
        %v1246 = vpop.permute.xlu0 %1245
        %1247 = vrot.lane.b32.xlu0 %v426, 24
        %v1248 = vpop.permute.xlu0 %1247
        %1249 = vrot.lane.b32.xlu0 %v427, 24
        %v1250 = vpop.permute.xlu0 %1249
        %1251 = vrot.lane.b32.xlu0 %v428, 24
        %v1252 = vpop.permute.xlu0 %1251
        %1253 = vrot.lane.b32.xlu0 %v429, 24
        %v1254 = vpop.permute.xlu0 %1253
        %1255 = vrot.lane.b32.xlu0 %v1210, 24
        %v1256 = vpop.permute.xlu0 %1255
        %1257 = vrot.lane.b32.xlu0 %v1211, 24
        %v1258 = vpop.permute.xlu0 %1257
        %1259 = vrot.lane.b32.xlu0 %v1212, 24
        %v1260 = vpop.permute.xlu0 %1259
        %v1262 = vunpack.c.l.b16 %v308
        %v1263 = vpack.c.b16 %v1262, %v1262
        %v1265 = vshll.u32 %v1210, 16
        %v1267 = vrot.slane %v1265, 1
        %v1268 = vsel %vm433, %v624, %v1267
        %v1269 = vshrl.u32 %v1210, 16
        %v1271 = vor.u32 %v1269, %v1267
        %v1273 = vshll.u32 %v1211, 16
        %v1275 = vrot.slane %v1273, 1
        %v1276 = vsel %vm433, %v1271, %v1275
        %v1277 = vshrl.u32 %v1211, 16
        %v1279 = vor.u32 %v1277, %v1275
        %v1281 = vshll.u32 %v1212, 16
        %v1283 = vrot.slane %v1281, 1
        %v1284 = vsel %vm433, %v1279, %v1283
        %v1285 = vshrl.u32 %v1212, 16
        %v1287 = vor.u32 %v1285, %v1283
        %v1289 = vshll.u32 %v1263, 16
        %v1291 = vrot.slane %v1289, 1
        %v1292 = vsel %vm433, %v1287, %v1291
        %1293 = vrot.lane.b32.xlu0 %v469, 28
        %v1294 = vpop.permute.xlu0 %1293
        %1295 = vrot.lane.b32.xlu0 %v477, 28
        %v1296 = vpop.permute.xlu0 %1295
        %1297 = vrot.lane.b32.xlu0 %v485, 28
        %v1298 = vpop.permute.xlu0 %1297
        %1299 = vrot.lane.b32.xlu0 %v493, 28
        %v1300 = vpop.permute.xlu0 %1299
        %1301 = vrot.lane.b32.xlu0 %v501, 28
        %v1302 = vpop.permute.xlu0 %1301
        %1303 = vrot.lane.b32.xlu0 %v509, 28
        %v1304 = vpop.permute.xlu0 %1303
        %1305 = vrot.lane.b32.xlu0 %v517, 28
        %v1306 = vpop.permute.xlu0 %1305
        %1307 = vrot.lane.b32.xlu0 %v525, 28
        %v1308 = vpop.permute.xlu0 %1307
        %1309 = vrot.lane.b32.xlu0 %v533, 28
        %v1310 = vpop.permute.xlu0 %1309
        %1311 = vrot.lane.b32.xlu0 %v541, 28
        %v1312 = vpop.permute.xlu0 %1311
        %1313 = vrot.lane.b32.xlu0 %v549, 28
        %v1314 = vpop.permute.xlu0 %1313
        %1315 = vrot.lane.b32.xlu0 %v557, 28
        %v1316 = vpop.permute.xlu0 %1315
        %1317 = vrot.lane.b32.xlu0 %v565, 28
        %v1318 = vpop.permute.xlu0 %1317
        %1319 = vrot.lane.b32.xlu0 %v573, 28
        %v1320 = vpop.permute.xlu0 %1319
        %1321 = vrot.lane.b32.xlu0 %v581, 28
        %v1322 = vpop.permute.xlu0 %1321
        %1323 = vrot.lane.b32.xlu0 %v589, 28
        %v1324 = vpop.permute.xlu0 %1323
        %1325 = vrot.lane.b32.xlu0 %v597, 28
        %v1326 = vpop.permute.xlu0 %1325
        %1327 = vrot.lane.b32.xlu0 %v605, 28
        %v1328 = vpop.permute.xlu0 %1327
        %1329 = vrot.lane.b32.xlu0 %v613, 28
        %v1330 = vpop.permute.xlu0 %1329
        %1331 = vrot.lane.b32.xlu0 %v621, 28
        %v1332 = vpop.permute.xlu0 %1331
        %1333 = vrot.lane.b32.xlu0 %v1268, 28
        %v1334 = vpop.permute.xlu0 %1333
        %1335 = vrot.lane.b32.xlu0 %v1276, 28
        %v1336 = vpop.permute.xlu0 %1335
        %1337 = vrot.lane.b32.xlu0 %v1284, 28
        %v1338 = vpop.permute.xlu0 %1337
        %1339 = vrot.lane.b32.xlu0 %v1292, 28
        %v1340 = vpop.permute.xlu0 %1339
        %v1342 = vunpack.c.l.b16 %v309
        %v1343 = vpack.c.b16 %v365, %v1342
        %v1344 = vrot.slane %v1343, 1
        %v1345 = vsel %vm681, %v1344, %v689
        %v1346 = vrot.slane %v1210, 1
        %v1347 = vsel %vm681, %v727, %v1346
        %v1348 = vrot.slane %v1211, 1
        %v1349 = vsel %vm681, %v1346, %v1348
        %v1350 = vrot.slane %v1212, 1
        %v1351 = vsel %vm681, %v1348, %v1350
        %v1352 = vrot.slane %v1263, 1
        %v1353 = vsel %vm681, %v1350, %v1352
        %1354 = vrot.lane.b32.xlu0 %v1345, 32
        %v1355 = vpop.permute.xlu0 %1354
        %1356 = vrot.lane.b32.xlu0 %v692, 32
        %v1357 = vpop.permute.xlu0 %1356
        %1358 = vrot.lane.b32.xlu0 %v694, 32
        %v1359 = vpop.permute.xlu0 %1358
        %1360 = vrot.lane.b32.xlu0 %v696, 32
        %v1361 = vpop.permute.xlu0 %1360
        %1362 = vrot.lane.b32.xlu0 %v698, 32
        %v1363 = vpop.permute.xlu0 %1362
        %1364 = vrot.lane.b32.xlu0 %v700, 32
        %v1365 = vpop.permute.xlu0 %1364
        %1366 = vrot.lane.b32.xlu0 %v702, 32
        %v1367 = vpop.permute.xlu0 %1366
        %1368 = vrot.lane.b32.xlu0 %v704, 32
        %v1369 = vpop.permute.xlu0 %1368
        %1370 = vrot.lane.b32.xlu0 %v706, 32
        %v1371 = vpop.permute.xlu0 %1370
        %1372 = vrot.lane.b32.xlu0 %v708, 32
        %v1373 = vpop.permute.xlu0 %1372
        %1374 = vrot.lane.b32.xlu0 %v710, 32
        %v1375 = vpop.permute.xlu0 %1374
        %1376 = vrot.lane.b32.xlu0 %v712, 32
        %v1377 = vpop.permute.xlu0 %1376
        %1378 = vrot.lane.b32.xlu0 %v714, 32
        %v1379 = vpop.permute.xlu0 %1378
        %1380 = vrot.lane.b32.xlu0 %v716, 32
        %v1381 = vpop.permute.xlu0 %1380
        %1382 = vrot.lane.b32.xlu0 %v718, 32
        %v1383 = vpop.permute.xlu0 %1382
        %1384 = vrot.lane.b32.xlu0 %v720, 32
        %v1385 = vpop.permute.xlu0 %1384
        %1386 = vrot.lane.b32.xlu0 %v722, 32
        %v1387 = vpop.permute.xlu0 %1386
        %1388 = vrot.lane.b32.xlu0 %v724, 32
        %v1389 = vpop.permute.xlu0 %1388
        %1390 = vrot.lane.b32.xlu0 %v726, 32
        %v1391 = vpop.permute.xlu0 %1390
        %1392 = vrot.lane.b32.xlu0 %v728, 32
        %v1393 = vpop.permute.xlu0 %1392
        %1394 = vrot.lane.b32.xlu0 %v1347, 32
        %v1395 = vpop.permute.xlu0 %1394
        %1396 = vrot.lane.b32.xlu0 %v1349, 32
        %v1397 = vpop.permute.xlu0 %1396
        %1398 = vrot.lane.b32.xlu0 %v1351, 32
        %v1399 = vpop.permute.xlu0 %1398
        %1400 = vrot.lane.b32.xlu0 %v1353, 32
        %v1401 = vpop.permute.xlu0 %1400
        %vm1402 = vcmask 31744
        %v1404 = vsel %vm1402, %v406, %v631
        %v1406 = vsel %vm1402, %v407, %v633
        %v1408 = vsel %vm1402, %v408, %v635
        %v1410 = vsel %vm1402, %v409, %v637
        %v1412 = vsel %vm1402, %v410, %v639
        %v1414 = vsel %vm1402, %v411, %v641
        %v1416 = vsel %vm1402, %v412, %v643
        %v1418 = vsel %vm1402, %v413, %v645
        %v1420 = vsel %vm1402, %v414, %v647
        %v1422 = vsel %vm1402, %v415, %v649
        %v1424 = vsel %vm1402, %v416, %v651
        %v1426 = vsel %vm1402, %v417, %v653
        %v1428 = vsel %vm1402, %v418, %v655
        %v1430 = vsel %vm1402, %v419, %v657
        %v1432 = vsel %vm1402, %v420, %v659
        %v1434 = vsel %vm1402, %v421, %v661
        %v1436 = vsel %vm1402, %v422, %v663
        %v1438 = vsel %vm1402, %v423, %v665
        %v1440 = vsel %vm1402, %v424, %v667
        %v1442 = vsel %vm1402, %v425, %v669
        %v1444 = vsel %vm1402, %v426, %v671
        %v1446 = vsel %vm1402, %v427, %v673
        %v1448 = vsel %vm1402, %v428, %v675
        %v1450 = vsel %vm1402, %v429, %v677
        %vm1451 = vcmask 64512
        %v1453 = vsel %vm1451, %v1404, %v732
        %v1455 = vsel %vm1451, %v1406, %v734
        %v1457 = vsel %vm1451, %v1408, %v736
        %v1459 = vsel %vm1451, %v1410, %v738
        %v1461 = vsel %vm1451, %v1412, %v740
        %v1463 = vsel %vm1451, %v1414, %v742
        %v1465 = vsel %vm1451, %v1416, %v744
        %v1467 = vsel %vm1451, %v1418, %v746
        %v1469 = vsel %vm1451, %v1420, %v748
        %v1471 = vsel %vm1451, %v1422, %v750
        %v1473 = vsel %vm1451, %v1424, %v752
        %v1475 = vsel %vm1451, %v1426, %v754
        %v1477 = vsel %vm1451, %v1428, %v756
        %v1479 = vsel %vm1451, %v1430, %v758
        %v1481 = vsel %vm1451, %v1432, %v760
        %v1483 = vsel %vm1451, %v1434, %v762
        %v1485 = vsel %vm1451, %v1436, %v764
        %v1487 = vsel %vm1451, %v1438, %v766
        %v1489 = vsel %vm1451, %v1440, %v768
        %v1491 = vsel %vm1451, %v1442, %v770
        %v1493 = vsel %vm1451, %v1444, %v772
        %v1495 = vsel %vm1451, %v1446, %v774
        %v1497 = vsel %vm1451, %v1448, %v776
        %v1499 = vsel %vm1451, %v1450, %v778
        %vm1500 = vcmask 97280
        %v1502 = vsel %vm1500, %v1453, %v810
        %v1504 = vsel %vm1500, %v1455, %v812
        %v1506 = vsel %vm1500, %v1457, %v814
        %v1508 = vsel %vm1500, %v1459, %v816
        %v1510 = vsel %vm1500, %v1461, %v818
        %v1512 = vsel %vm1500, %v1463, %v820
        %v1514 = vsel %vm1500, %v1465, %v822
        %v1516 = vsel %vm1500, %v1467, %v824
        %v1518 = vsel %vm1500, %v1469, %v826
        %v1520 = vsel %vm1500, %v1471, %v828
        %v1522 = vsel %vm1500, %v1473, %v830
        %v1524 = vsel %vm1500, %v1475, %v832
        %v1526 = vsel %vm1500, %v1477, %v834
        %v1528 = vsel %vm1500, %v1479, %v836
        %v1530 = vsel %vm1500, %v1481, %v838
        %v1532 = vsel %vm1500, %v1483, %v840
        %v1534 = vsel %vm1500, %v1485, %v842
        %v1536 = vsel %vm1500, %v1487, %v844
        %v1538 = vsel %vm1500, %v1489, %v846
        %v1540 = vsel %vm1500, %v1491, %v848
        %v1542 = vsel %vm1500, %v1493, %v850
        %v1544 = vsel %vm1500, %v1495, %v852
        %v1546 = vsel %vm1500, %v1497, %v854
        %v1548 = vsel %vm1500, %v1499, %v856
        %vm1549 = vcmask 130048
        %v1551 = vsel %vm1549, %v1502, %v1057
        %v1553 = vsel %vm1549, %v1504, %v1059
        %v1555 = vsel %vm1549, %v1506, %v1061
        %v1557 = vsel %vm1549, %v1508, %v1063
        %v1559 = vsel %vm1549, %v1510, %v1065
        %v1561 = vsel %vm1549, %v1512, %v1067
        %v1563 = vsel %vm1549, %v1514, %v1069
        %v1565 = vsel %vm1549, %v1516, %v1071
        %v1567 = vsel %vm1549, %v1518, %v1073
        %v1569 = vsel %vm1549, %v1520, %v1075
        %v1571 = vsel %vm1549, %v1522, %v1077
        %v1573 = vsel %vm1549, %v1524, %v1079
        %v1575 = vsel %vm1549, %v1526, %v1081
        %v1577 = vsel %vm1549, %v1528, %v1083
        %v1579 = vsel %vm1549, %v1530, %v1085
        %v1581 = vsel %vm1549, %v1532, %v1087
        %v1583 = vsel %vm1549, %v1534, %v1089
        %v1585 = vsel %vm1549, %v1536, %v1091
        %v1587 = vsel %vm1549, %v1538, %v1093
        %v1589 = vsel %vm1549, %v1540, %v1095
        %v1591 = vsel %vm1549, %v1542, %v1097
        %v1593 = vsel %vm1549, %v1544, %v1099
        %v1595 = vsel %vm1549, %v1546, %v1101
        %v1597 = vsel %vm1549, %v1548, %v1103
        %vm1598 = vcmask 162816
        %v1600 = vsel %vm1598, %v1551, %v1157
        %v1602 = vsel %vm1598, %v1553, %v1159
        %v1604 = vsel %vm1598, %v1555, %v1161
        %v1606 = vsel %vm1598, %v1557, %v1163
        %v1608 = vsel %vm1598, %v1559, %v1165
        %v1610 = vsel %vm1598, %v1561, %v1167
        %v1612 = vsel %vm1598, %v1563, %v1169
        %v1614 = vsel %vm1598, %v1565, %v1171
        %v1616 = vsel %vm1598, %v1567, %v1173
        %v1618 = vsel %vm1598, %v1569, %v1175
        %v1620 = vsel %vm1598, %v1571, %v1177
        %v1622 = vsel %vm1598, %v1573, %v1179
        %v1624 = vsel %vm1598, %v1575, %v1181
        %v1626 = vsel %vm1598, %v1577, %v1183
        %v1628 = vsel %vm1598, %v1579, %v1185
        %v1630 = vsel %vm1598, %v1581, %v1187
        %v1632 = vsel %vm1598, %v1583, %v1189
        %v1634 = vsel %vm1598, %v1585, %v1191
        %v1636 = vsel %vm1598, %v1587, %v1193
        %v1638 = vsel %vm1598, %v1589, %v1195
        %v1640 = vsel %vm1598, %v1591, %v1197
        %v1642 = vsel %vm1598, %v1593, %v1199
        %v1644 = vsel %vm1598, %v1595, %v1201
        %v1646 = vsel %vm1598, %v1597, %v1203
        %vm1647 = vcmask 195584
        %v1649 = vsel %vm1647, %v1600, %v1214
        %v1651 = vsel %vm1647, %v1602, %v1216
        %v1653 = vsel %vm1647, %v1604, %v1218
        %v1655 = vsel %vm1647, %v1606, %v1220
        %v1657 = vsel %vm1647, %v1608, %v1222
        %v1659 = vsel %vm1647, %v1610, %v1224
        %v1661 = vsel %vm1647, %v1612, %v1226
        %v1663 = vsel %vm1647, %v1614, %v1228
        %v1665 = vsel %vm1647, %v1616, %v1230
        %v1667 = vsel %vm1647, %v1618, %v1232
        %v1669 = vsel %vm1647, %v1620, %v1234
        %v1671 = vsel %vm1647, %v1622, %v1236
        %v1673 = vsel %vm1647, %v1624, %v1238
        %v1675 = vsel %vm1647, %v1626, %v1240
        %v1677 = vsel %vm1647, %v1628, %v1242
        %v1679 = vsel %vm1647, %v1630, %v1244
        %v1681 = vsel %vm1647, %v1632, %v1246
        %v1683 = vsel %vm1647, %v1634, %v1248
        %v1685 = vsel %vm1647, %v1636, %v1250
        %v1687 = vsel %vm1647, %v1638, %v1252
        %v1689 = vsel %vm1647, %v1640, %v1254
        %v1691 = vsel %vm1647, %v1642, %v1256
        %v1693 = vsel %vm1647, %v1644, %v1258
        %v1695 = vsel %vm1647, %v1646, %v1260
        %vm1696 = vcmask 228352
        %v1698 = vsel %vm1696, %v1649, %v1294
        %v1700 = vsel %vm1696, %v1651, %v1296
        %v1702 = vsel %vm1696, %v1653, %v1298
        %v1704 = vsel %vm1696, %v1655, %v1300
        %v1706 = vsel %vm1696, %v1657, %v1302
        %v1708 = vsel %vm1696, %v1659, %v1304
        %v1710 = vsel %vm1696, %v1661, %v1306
        %v1712 = vsel %vm1696, %v1663, %v1308
        %v1714 = vsel %vm1696, %v1665, %v1310
        %v1716 = vsel %vm1696, %v1667, %v1312
        %v1718 = vsel %vm1696, %v1669, %v1314
        %v1720 = vsel %vm1696, %v1671, %v1316
        %v1722 = vsel %vm1696, %v1673, %v1318
        %v1724 = vsel %vm1696, %v1675, %v1320
        %v1726 = vsel %vm1696, %v1677, %v1322
        %v1728 = vsel %vm1696, %v1679, %v1324
        %v1730 = vsel %vm1696, %v1681, %v1326
        %v1732 = vsel %vm1696, %v1683, %v1328
        %v1734 = vsel %vm1696, %v1685, %v1330
        %v1736 = vsel %vm1696, %v1687, %v1332
        %v1738 = vsel %vm1696, %v1689, %v1334
        %v1740 = vsel %vm1696, %v1691, %v1336
        %v1742 = vsel %vm1696, %v1693, %v1338
        %v1744 = vsel %vm1696, %v1695, %v1340
        %vm1745 = vcmask 261120
        %v1747 = vsel %vm1745, %v1698, %v1355
        %v1749 = vsel %vm1745, %v1700, %v1357
        %v1751 = vsel %vm1745, %v1702, %v1359
        %v1753 = vsel %vm1745, %v1704, %v1361
        %v1755 = vsel %vm1745, %v1706, %v1363
        %v1757 = vsel %vm1745, %v1708, %v1365
        %v1759 = vsel %vm1745, %v1710, %v1367
        %v1761 = vsel %vm1745, %v1712, %v1369
        %v1763 = vsel %vm1745, %v1714, %v1371
        %v1765 = vsel %vm1745, %v1716, %v1373
        %v1767 = vsel %vm1745, %v1718, %v1375
        %v1769 = vsel %vm1745, %v1720, %v1377
        %v1771 = vsel %vm1745, %v1722, %v1379
        %v1773 = vsel %vm1745, %v1724, %v1381
        %v1775 = vsel %vm1745, %v1726, %v1383
        %v1777 = vsel %vm1745, %v1728, %v1385
        %v1779 = vsel %vm1745, %v1730, %v1387
        %v1781 = vsel %vm1745, %v1732, %v1389
        %v1783 = vsel %vm1745, %v1734, %v1391
        %v1785 = vsel %vm1745, %v1736, %v1393
        %v1787 = vsel %vm1745, %v1738, %v1395
        %v1789 = vsel %vm1745, %v1740, %v1397
        %v1791 = vsel %vm1745, %v1742, %v1399
        %v1793 = vsel %vm1745, %v1744, %v1401
        %v1794 = vld [vmem:[%s1] sm:$0xf]
        %v1795 = vld [vmem:[%s1 + $0x4] sm:$0xf]
        %v1796 = vld [vmem:[%s1 + $0x8] sm:$0xf]
        %v1797 = vld [vmem:[%s1 + $0xc] sm:$0xf]
        %v1798 = vld [vmem:[%s1 + $0x10] sm:$0x3]
        %v1799 = vld [vmem:[%s2] sm:$0x1]
        %v1801 = vlaneseq
        %v1802 = vshrl.u32 %v1801, 7
        %v1803 = vsub.s32 0, %v1802
        %v1804 = vrot.slane %v1799, %v1803
        %v1811 = vunpack.c.l.b16 %v1794
        %v1812 = vunpack.c.l.b16 %v1795
        %v1813 = vunpack.c.l.b16 %v1796
        %v1814 = vunpack.c.l.b16 %v1797
        %v1815 = vunpack.c.l.b16 %v1798
        %v1816 = vpack.c.b16 %v1812, %v1811
        %v1817 = vpack.c.b16 %v1814, %v1813
        %v1818 = vpack.c.b16 %v1815, %v1815
        %vm1821 = vcmask 293888
        %v1822 = vsel %vm1821, %v1747, 0
        %v1824 = vsel %vm1821, %v1749, 0
        %v1826 = vsel %vm1821, %v1751, 0
        %v1828 = vsel %vm1821, %v1753, 0
        %v1830 = vsel %vm1821, %v1755, 0
        %v1832 = vsel %vm1821, %v1757, 0
        %v1834 = vsel %vm1821, %v1759, 0
        %v1836 = vsel %vm1821, %v1761, 0
        %v1838 = vsel %vm1821, %v1763, 0
        %v1840 = vsel %vm1821, %v1765, 0
        %v1842 = vsel %vm1821, %v1767, 0
        %v1844 = vsel %vm1821, %v1769, 0
        %v1846 = vsel %vm1821, %v1771, 0
        %v1848 = vsel %vm1821, %v1773, 0
        %v1850 = vsel %vm1821, %v1775, 0
        %v1852 = vsel %vm1821, %v1777, 0
        %v1854 = vsel %vm1821, %v1779, 0
        %v1856 = vsel %vm1821, %v1781, 0
        %v1858 = vsel %vm1821, %v1783, 0
        %v1860 = vsel %vm1821, %v1785, 0
        %v1862 = vsel %vm1821, %v1787, 0
        %v1864 = vsel %vm1821, %v1789, 0
        %v1866 = vsel %vm1821, %v1791, 0
        %v1868 = vsel %vm1821, %v1793, 0
        %vm1870 = vcmask 1041408
        %v1872 = vsel %vm1870, %v1818, 0
        %1874 = vmatprep.subr.bf16.mxu0 0
        %1875 = vmatpush1.bf16.msra.mxu0 %v1816
        %1876 = vmatprep.subr.bf16.mxu0 0
        %1877 = vmatpush1.bf16.msra.mxu0 %v1817
        %1878 = vmatprep.subr.bf16.mxu0 0
        %1879 = vmatpush1.bf16.msra.mxu0 %v1872
        %1880 = vmatprep.subr.bf16.mxu0 0
        %1881 = vmatpush1.bf16.msra.mxu0 0
        %1882 = vmatprep.subr.bf16.mxu0 0
        %1883 = vmatpush1.bf16.msra.mxu0 0
        %1884 = vmatprep.subr.bf16.mxu0 0
        %1885 = vmatpush1.bf16.msra.mxu0 0
        %1886 = vmatprep.subr.bf16.mxu0 0
        %1887 = vmatpush1.bf16.msra.mxu0 0
        %1888 = vmatprep.subr.bf16.mxu0 0
        %1889 = vmatpush1.bf16.msra.mxu0 0
        %1890 = vmatprep.subr.bf16.mxu0 0
        %1891 = vmatpush1.bf16.msra.mxu0 0
        %1892 = vmatprep.subr.bf16.mxu0 0
        %1893 = vmatpush1.bf16.msra.mxu0 0
        %1894 = vmatprep.subr.bf16.mxu0 0
        %1895 = vmatpush1.bf16.msra.mxu0 0
        %1896 = vmatprep.subr.bf16.mxu0 0
        %1897 = vmatpush1.bf16.msra.mxu0 0
        %1898 = vmatprep.subr.bf16.mxu0 0
        %1899 = vmatpush1.bf16.msra.mxu0 0
        %1900 = vmatprep.subr.bf16.mxu0 0
        %1901 = vmatpush1.bf16.msra.mxu0 0
        %1902 = vmatprep.subr.bf16.mxu0 0
        %1903 = vmatpush1.bf16.msra.mxu0 0
        %1904 = vmatprep.subr.bf16.mxu0 0
        %1905 = vmatpush1.bf16.msra.mxu0 0
        %1906 = vmatprep.mubr.bf16.mxu0 0
        %1907 = vmatmul.mubr.bf16.gmra.mrb[0].mxu0 %v1822
        %v1908 = vpop.f32.mrb[0].mxu0
        %v1909 = vadd.f32 %v1804, %v1908
        %v1910 = vpop.f32.mrb[0].mxu0
        %v1911 = vpop.f32.mrb[0].mxu0
        %v1912 = vadd.f32 %v1804, %v1911
        %v1913 = vpop.f32.mrb[0].mxu0
        %1914 = vmatprep.mubr.bf16.mxu0 0
        %1915 = vmatmul.mubr.bf16.gmra.mrb[0].mxu0 %v1824
        %v1916 = vpop.f32.mrb[0].mxu0
        %v1917 = vadd.f32 %v1804, %v1916
        %v1918 = vpop.f32.mrb[0].mxu0
        %v1919 = vpop.f32.mrb[0].mxu0
        %v1920 = vadd.f32 %v1804, %v1919
        %v1921 = vpop.f32.mrb[0].mxu0
        %1922 = vmatprep.mubr.bf16.mxu0 0
        %1923 = vmatmul.mubr.bf16.gmra.mrb[0].mxu0 %v1826
        %v1924 = vpop.f32.mrb[0].mxu0
        %v1925 = vadd.f32 %v1804, %v1924
        %v1926 = vpop.f32.mrb[0].mxu0
        %v1927 = vpop.f32.mrb[0].mxu0
        %v1928 = vadd.f32 %v1804, %v1927
        %v1929 = vpop.f32.mrb[0].mxu0
        %1930 = vmatprep.mubr.bf16.mxu0 0
        %1931 = vmatmul.mubr.bf16.gmra.mrb[0].mxu0 %v1828
        %v1932 = vpop.f32.mrb[0].mxu0
        %v1933 = vadd.f32 %v1804, %v1932
        %v1934 = vpop.f32.mrb[0].mxu0
        %v1935 = vpop.f32.mrb[0].mxu0
        %v1936 = vadd.f32 %v1804, %v1935
        %v1937 = vpop.f32.mrb[0].mxu0
        %1938 = vmatprep.mubr.bf16.mxu0 0
        %1939 = vmatmul.mubr.bf16.gmra.mrb[0].mxu0 %v1830
        %v1940 = vpop.f32.mrb[0].mxu0
        %v1941 = vadd.f32 %v1804, %v1940
        %v1942 = vpop.f32.mrb[0].mxu0
        %v1943 = vpop.f32.mrb[0].mxu0
        %v1944 = vadd.f32 %v1804, %v1943
        %v1945 = vpop.f32.mrb[0].mxu0
        %1946 = vmatprep.mubr.bf16.mxu0 0
        %1947 = vmatmul.mubr.bf16.gmra.mrb[0].mxu0 %v1832
        %v1948 = vpop.f32.mrb[0].mxu0
        %v1949 = vadd.f32 %v1804, %v1948
        %v1950 = vpop.f32.mrb[0].mxu0
        %v1951 = vpop.f32.mrb[0].mxu0
        %v1952 = vadd.f32 %v1804, %v1951
        %v1953 = vpop.f32.mrb[0].mxu0
        %1954 = vmatprep.mubr.bf16.mxu0 0
        %1955 = vmatmul.mubr.bf16.gmra.mrb[0].mxu0 %v1834
        %v1956 = vpop.f32.mrb[0].mxu0
        %v1957 = vadd.f32 %v1804, %v1956
        %v1958 = vpop.f32.mrb[0].mxu0
        %v1959 = vpop.f32.mrb[0].mxu0
        %v1960 = vadd.f32 %v1804, %v1959
        %v1961 = vpop.f32.mrb[0].mxu0
        %1962 = vmatprep.mubr.bf16.mxu0 0
        %1963 = vmatmul.mubr.bf16.gmra.mrb[0].mxu0 %v1836
        %v1964 = vpop.f32.mrb[0].mxu0
        %v1965 = vadd.f32 %v1804, %v1964
        %v1966 = vpop.f32.mrb[0].mxu0
        %v1967 = vpop.f32.mrb[0].mxu0
        %v1968 = vadd.f32 %v1804, %v1967
        %v1969 = vpop.f32.mrb[0].mxu0
        %1970 = vmatprep.mubr.bf16.mxu0 0
        %1971 = vmatmul.mubr.bf16.gmra.mrb[0].mxu0 %v1838
        %v1972 = vpop.f32.mrb[0].mxu0
        %v1973 = vadd.f32 %v1804, %v1972
        %v1974 = vpop.f32.mrb[0].mxu0
        %v1975 = vpop.f32.mrb[0].mxu0
        %v1976 = vadd.f32 %v1804, %v1975
        %v1977 = vpop.f32.mrb[0].mxu0
        %1978 = vmatprep.mubr.bf16.mxu0 0
        %1979 = vmatmul.mubr.bf16.gmra.mrb[0].mxu0 %v1840
        %v1980 = vpop.f32.mrb[0].mxu0
        %v1981 = vadd.f32 %v1804, %v1980
        %v1982 = vpop.f32.mrb[0].mxu0
        %v1983 = vpop.f32.mrb[0].mxu0
        %v1984 = vadd.f32 %v1804, %v1983
        %v1985 = vpop.f32.mrb[0].mxu0
        %1986 = vmatprep.mubr.bf16.mxu0 0
        %1987 = vmatmul.mubr.bf16.gmra.mrb[0].mxu0 %v1842
        %v1988 = vpop.f32.mrb[0].mxu0
        %v1989 = vadd.f32 %v1804, %v1988
        %v1990 = vpop.f32.mrb[0].mxu0
        %v1991 = vpop.f32.mrb[0].mxu0
        %v1992 = vadd.f32 %v1804, %v1991
        %v1993 = vpop.f32.mrb[0].mxu0
        %1994 = vmatprep.mubr.bf16.mxu0 0
        %1995 = vmatmul.mubr.bf16.gmra.mrb[0].mxu0 %v1844
        %v1996 = vpop.f32.mrb[0].mxu0
        %v1997 = vadd.f32 %v1804, %v1996
        %v1998 = vpop.f32.mrb[0].mxu0
        %v1999 = vpop.f32.mrb[0].mxu0
        %v2000 = vadd.f32 %v1804, %v1999
        %v2001 = vpop.f32.mrb[0].mxu0
        %2002 = vmatprep.mubr.bf16.mxu0 0
        %2003 = vmatmul.mubr.bf16.gmra.mrb[0].mxu0 %v1846
        %v2004 = vpop.f32.mrb[0].mxu0
        %v2005 = vadd.f32 %v1804, %v2004
        %v2006 = vpop.f32.mrb[0].mxu0
        %v2007 = vpop.f32.mrb[0].mxu0
        %v2008 = vadd.f32 %v1804, %v2007
        %v2009 = vpop.f32.mrb[0].mxu0
        %2010 = vmatprep.mubr.bf16.mxu0 0
        %2011 = vmatmul.mubr.bf16.gmra.mrb[0].mxu0 %v1848
        %v2012 = vpop.f32.mrb[0].mxu0
        %v2013 = vadd.f32 %v1804, %v2012
        %v2014 = vpop.f32.mrb[0].mxu0
        %v2015 = vpop.f32.mrb[0].mxu0
        %v2016 = vadd.f32 %v1804, %v2015
        %v2017 = vpop.f32.mrb[0].mxu0
        %2018 = vmatprep.mubr.bf16.mxu0 0
        %2019 = vmatmul.mubr.bf16.gmra.mrb[0].mxu0 %v1850
        %v2020 = vpop.f32.mrb[0].mxu0
        %v2021 = vadd.f32 %v1804, %v2020
        %v2022 = vpop.f32.mrb[0].mxu0
        %v2023 = vpop.f32.mrb[0].mxu0
        %v2024 = vadd.f32 %v1804, %v2023
        %v2025 = vpop.f32.mrb[0].mxu0
        %2026 = vmatprep.mubr.bf16.mxu0 0
        %2027 = vmatmul.mubr.bf16.gmra.mrb[0].mxu0 %v1852
        %v2028 = vpop.f32.mrb[0].mxu0
        %v2029 = vadd.f32 %v1804, %v2028
        %v2030 = vpop.f32.mrb[0].mxu0
        %v2031 = vpop.f32.mrb[0].mxu0
        %v2032 = vadd.f32 %v1804, %v2031
        %v2033 = vpop.f32.mrb[0].mxu0
        %2034 = vmatprep.mubr.bf16.mxu0 0
        %2035 = vmatmul.mubr.bf16.gmra.mrb[0].mxu0 %v1854
        %v2036 = vpop.f32.mrb[0].mxu0
        %v2037 = vadd.f32 %v1804, %v2036
        %v2038 = vpop.f32.mrb[0].mxu0
        %v2039 = vpop.f32.mrb[0].mxu0
        %v2040 = vadd.f32 %v1804, %v2039
        %v2041 = vpop.f32.mrb[0].mxu0
        %2042 = vmatprep.mubr.bf16.mxu0 0
        %2043 = vmatmul.mubr.bf16.gmra.mrb[0].mxu0 %v1856
        %v2044 = vpop.f32.mrb[0].mxu0
        %v2045 = vadd.f32 %v1804, %v2044
        %v2046 = vpop.f32.mrb[0].mxu0
        %v2047 = vpop.f32.mrb[0].mxu0
        %v2048 = vadd.f32 %v1804, %v2047
        %v2049 = vpop.f32.mrb[0].mxu0
        %2050 = vmatprep.mubr.bf16.mxu0 0
        %2051 = vmatmul.mubr.bf16.gmra.mrb[0].mxu0 %v1858
        %v2052 = vpop.f32.mrb[0].mxu0
        %v2053 = vadd.f32 %v1804, %v2052
        %v2054 = vpop.f32.mrb[0].mxu0
        %v2055 = vpop.f32.mrb[0].mxu0
        %v2056 = vadd.f32 %v1804, %v2055
        %v2057 = vpop.f32.mrb[0].mxu0
        %2058 = vmatprep.mubr.bf16.mxu0 0
        %2059 = vmatmul.mubr.bf16.gmra.mrb[0].mxu0 %v1860
        %v2060 = vpop.f32.mrb[0].mxu0
        %v2061 = vadd.f32 %v1804, %v2060
        %v2062 = vpop.f32.mrb[0].mxu0
        %v2063 = vpop.f32.mrb[0].mxu0
        %v2064 = vadd.f32 %v1804, %v2063
        %v2065 = vpop.f32.mrb[0].mxu0
        %2066 = vmatprep.mubr.bf16.mxu0 0
        %2067 = vmatmul.mubr.bf16.gmra.mrb[0].mxu0 %v1862
        %v2068 = vpop.f32.mrb[0].mxu0
        %v2069 = vadd.f32 %v1804, %v2068
        %v2070 = vpop.f32.mrb[0].mxu0
        %v2071 = vpop.f32.mrb[0].mxu0
        %v2072 = vadd.f32 %v1804, %v2071
        %v2073 = vpop.f32.mrb[0].mxu0
        %2074 = vmatprep.mubr.bf16.mxu0 0
        %2075 = vmatmul.mubr.bf16.gmra.mrb[0].mxu0 %v1864
        %v2076 = vpop.f32.mrb[0].mxu0
        %v2077 = vadd.f32 %v1804, %v2076
        %v2078 = vpop.f32.mrb[0].mxu0
        %v2079 = vpop.f32.mrb[0].mxu0
        %v2080 = vadd.f32 %v1804, %v2079
        %v2081 = vpop.f32.mrb[0].mxu0
        %2082 = vmatprep.mubr.bf16.mxu0 0
        %2083 = vmatmul.mubr.bf16.gmra.mrb[0].mxu0 %v1866
        %v2084 = vpop.f32.mrb[0].mxu0
        %v2085 = vadd.f32 %v1804, %v2084
        %v2086 = vpop.f32.mrb[0].mxu0
        %v2087 = vpop.f32.mrb[0].mxu0
        %v2088 = vadd.f32 %v1804, %v2087
        %v2089 = vpop.f32.mrb[0].mxu0
        %2090 = vmatprep.mubr.bf16.mxu0 0
        %2091 = vmatmul.mubr.bf16.gmra.mrb[0].mxu0 %v1868
        %v2092 = vpop.f32.mrb[0].mxu0
        %v2093 = vadd.f32 %v1804, %v2092
        %v2094 = vpop.f32.mrb[0].mxu0
        %v2095 = vpop.f32.mrb[0].mxu0
        %v2096 = vadd.f32 %v1804, %v2095
        %v2097 = vpop.f32.mrb[0].mxu0
        %2098 = vdwg.mxu0
        %v2099 = vmax.f32 %v1909, 0.0
        %v2100 = vmax.f32 %v1912, 0.0
        %v2101 = vmax.f32 %v1917, 0.0
        %v2102 = vmax.f32 %v1920, 0.0
        %v2103 = vmax.f32 %v1925, 0.0
        %v2104 = vmax.f32 %v1928, 0.0
        %v2105 = vmax.f32 %v1933, 0.0
        %v2106 = vmax.f32 %v1936, 0.0
        %v2107 = vmax.f32 %v1941, 0.0
        %v2108 = vmax.f32 %v1944, 0.0
        %v2109 = vmax.f32 %v1949, 0.0
        %v2110 = vmax.f32 %v1952, 0.0
        %v2111 = vmax.f32 %v1957, 0.0
        %v2112 = vmax.f32 %v1960, 0.0
        %v2113 = vmax.f32 %v1965, 0.0
        %v2114 = vmax.f32 %v1968, 0.0
        %v2115 = vmax.f32 %v1973, 0.0
        %v2116 = vmax.f32 %v1976, 0.0
        %v2117 = vmax.f32 %v1981, 0.0
        %v2118 = vmax.f32 %v1984, 0.0
        %v2119 = vmax.f32 %v1989, 0.0
        %v2120 = vmax.f32 %v1992, 0.0
        %v2121 = vmax.f32 %v1997, 0.0
        %v2122 = vmax.f32 %v2000, 0.0
        %v2123 = vmax.f32 %v2005, 0.0
        %v2124 = vmax.f32 %v2008, 0.0
        %v2125 = vmax.f32 %v2013, 0.0
        %v2126 = vmax.f32 %v2016, 0.0
        %v2127 = vmax.f32 %v2021, 0.0
        %v2128 = vmax.f32 %v2024, 0.0
        %v2129 = vmax.f32 %v2029, 0.0
        %v2130 = vmax.f32 %v2032, 0.0
        %v2131 = vmax.f32 %v2037, 0.0
        %v2132 = vmax.f32 %v2040, 0.0
        %v2133 = vmax.f32 %v2045, 0.0
        %v2134 = vmax.f32 %v2048, 0.0
        %v2135 = vmax.f32 %v2053, 0.0
        %v2136 = vmax.f32 %v2056, 0.0
        %v2137 = vmax.f32 %v2061, 0.0
        %v2138 = vmax.f32 %v2064, 0.0
        %v2139 = vmax.f32 %v2069, 0.0
        %v2140 = vmax.f32 %v2072, 0.0
        %v2141 = vmax.f32 %v2077, 0.0
        %v2142 = vmax.f32 %v2080, 0.0
        %v2143 = vmax.f32 %v2085, 0.0
        %v2144 = vmax.f32 %v2088, 0.0
        %v2145 = vmax.f32 %v2093, 0.0
        %v2146 = vmax.f32 %v2096, 0.0
        %v2147 = vld [vmem:[%s3] sm:$0x7]
        %v2149 = vlaneseq
        %v2150 = vshrl.u32 %v2149, 7
        %v2151 = vsub.s32 0, %v2150
        %v2152 = vrot.slane %v2147, %v2151
        %v2153 = vlaneseq
        %v2154 = vshrl.u32 %v2153, 7
        %v2155 = vsub.s32 1, %v2154
        %v2156 = vrot.slane %v2147, %v2155
        %v2157 = vlaneseq
        %v2158 = vshrl.u32 %v2157, 7
        %v2159 = vsub.s32 2, %v2158
        %v2160 = vrot.slane %v2147, %v2159
        %2164 = vmatprep.subr.mxu0 0.0
        %2165 = vmatpush1.msra.mxu0 %v2099
        %2166 = vmatprep.subr.mxu0 0.0
        %2167 = vmatpush1.msra.mxu0 %v2100
        %2168 = vmatprep.subr.mxu0 0.0
        %2169 = vmatpush1.msra.mxu0 %v2101
        %2170 = vmatprep.subr.mxu0 0.0
        %2171 = vmatpush1.msra.mxu0 %v2102
        %2172 = vmatprep.subr.mxu0 0.0
        %2173 = vmatpush1.msra.mxu0 %v2103
        %2174 = vmatprep.subr.mxu0 0.0
        %2175 = vmatpush1.msra.mxu0 %v2104
        %2176 = vmatprep.subr.mxu0 0.0
        %2177 = vmatpush1.msra.mxu0 %v2105
        %2178 = vmatprep.subr.mxu0 0.0
        %2179 = vmatpush1.msra.mxu0 %v2106
        %2180 = vmatprep.subr.mxu0 0.0
        %2181 = vmatpush1.msra.mxu0 %v2107
        %2182 = vmatprep.subr.mxu0 0.0
        %2183 = vmatpush1.msra.mxu0 %v2108
        %2184 = vmatprep.subr.mxu0 0.0
        %2185 = vmatpush1.msra.mxu0 %v2109
        %2186 = vmatprep.subr.mxu0 0.0
        %2187 = vmatpush1.msra.mxu0 %v2110
        %2188 = vmatprep.subr.mxu0 0.0
        %2189 = vmatpush1.msra.mxu0 %v2111
        %2190 = vmatprep.subr.mxu0 0.0
        %2191 = vmatpush1.msra.mxu0 %v2112
        %2192 = vmatprep.subr.mxu0 0.0
        %2193 = vmatpush1.msra.mxu0 %v2113
        %2194 = vmatprep.subr.mxu0 0.0
        %2195 = vmatpush1.msra.mxu0 %v2114
        %2196 = vmatprep.subr.mxu0 0.0
        %2197 = vmatpush1.msra.mxu0 %v2115
        %2198 = vmatprep.subr.mxu0 0.0
        %2199 = vmatpush1.msra.mxu0 %v2116
        %2200 = vmatprep.subr.mxu0 0.0
        %2201 = vmatpush1.msra.mxu0 %v2117
        %2202 = vmatprep.subr.mxu0 0.0
        %2203 = vmatpush1.msra.mxu0 %v2118
        %2204 = vmatprep.subr.mxu0 0.0
        %2205 = vmatpush1.msra.mxu0 %v2119
        %2206 = vmatprep.subr.mxu0 0.0
        %2207 = vmatpush1.msra.mxu0 %v2120
        %2208 = vmatprep.subr.mxu0 0.0
        %2209 = vmatpush1.msra.mxu0 %v2121
        %2210 = vmatprep.subr.mxu0 0.0
        %2211 = vmatpush1.msra.mxu0 %v2122
        %2212 = vmatprep.subr.mxu0 0.0
        %2213 = vmatpush1.msra.mxu0 %v2123
        %2214 = vmatprep.subr.mxu0 0.0
        %2215 = vmatpush1.msra.mxu0 %v2124
        %2216 = vmatprep.subr.mxu0 0.0
        %2217 = vmatpush1.msra.mxu0 %v2125
        %2218 = vmatprep.subr.mxu0 0.0
        %2219 = vmatpush1.msra.mxu0 %v2126
        %2220 = vmatprep.subr.mxu0 0.0
        %2221 = vmatpush1.msra.mxu0 %v2127
        %2222 = vmatprep.subr.mxu0 0.0
        %2223 = vmatpush1.msra.mxu0 %v2128
        %2224 = vmatprep.subr.mxu0 0.0
        %2225 = vmatpush1.msra.mxu0 %v2129
        %2226 = vmatprep.subr.mxu0 0.0
        %2227 = vmatpush1.msra.mxu0 %v2130
        %2228 = vmatprep.mubr.f32.mxu0 %v2156
        %2229 = vmatmul.mubr.f32.gmra.mrb[0].mxu0 %v2152
        %v2230 = vpop.f32.mrb[0].mxu0
        %v2231 = vadd.f32 0.0, %v2230
        %v2232 = vpop.f32.mrb[0].mxu0
        %2233 = vdwg.mxu0
        %2234 = vmatprep.subr.mxu0 0.0
        %2235 = vmatpush1.msra.mxu0 %v2131
        %2236 = vmatprep.subr.mxu0 0.0
        %2237 = vmatpush1.msra.mxu0 %v2132
        %2238 = vmatprep.subr.mxu0 0.0
        %2239 = vmatpush1.msra.mxu0 %v2133
        %2240 = vmatprep.subr.mxu0 0.0
        %2241 = vmatpush1.msra.mxu0 %v2134
        %2242 = vmatprep.subr.mxu0 0.0
        %2243 = vmatpush1.msra.mxu0 %v2135
        %2244 = vmatprep.subr.mxu0 0.0
        %2245 = vmatpush1.msra.mxu0 %v2136
        %2246 = vmatprep.subr.mxu0 0.0
        %2247 = vmatpush1.msra.mxu0 %v2137
        %2248 = vmatprep.subr.mxu0 0.0
        %2249 = vmatpush1.msra.mxu0 %v2138
        %2250 = vmatprep.subr.mxu0 0.0
        %2251 = vmatpush1.msra.mxu0 %v2139
        %2252 = vmatprep.subr.mxu0 0.0
        %2253 = vmatpush1.msra.mxu0 %v2140
        %2254 = vmatprep.subr.mxu0 0.0
        %2255 = vmatpush1.msra.mxu0 %v2141
        %2256 = vmatprep.subr.mxu0 0.0
        %2257 = vmatpush1.msra.mxu0 %v2142
        %2258 = vmatprep.subr.mxu0 0.0
        %2259 = vmatpush1.msra.mxu0 %v2143
        %2260 = vmatprep.subr.mxu0 0.0
        %2261 = vmatpush1.msra.mxu0 %v2144
        %2262 = vmatprep.subr.mxu0 0.0
        %2263 = vmatpush1.msra.mxu0 %v2145
        %2264 = vmatprep.subr.mxu0 0.0
        %2265 = vmatpush1.msra.mxu0 %v2146
        %2266 = vmatprep.subr.mxu0 0.0
        %2267 = vmatpush1.msra.mxu0 0.0
        %2268 = vmatprep.subr.mxu0 0.0
        %2269 = vmatpush1.msra.mxu0 0.0
        %2270 = vmatprep.subr.mxu0 0.0
        %2271 = vmatpush1.msra.mxu0 0.0
        %2272 = vmatprep.subr.mxu0 0.0
        %2273 = vmatpush1.msra.mxu0 0.0
        %2274 = vmatprep.subr.mxu0 0.0
        %2275 = vmatpush1.msra.mxu0 0.0
        %2276 = vmatprep.subr.mxu0 0.0
        %2277 = vmatpush1.msra.mxu0 0.0
        %2278 = vmatprep.subr.mxu0 0.0
        %2279 = vmatpush1.msra.mxu0 0.0
        %2280 = vmatprep.subr.mxu0 0.0
        %2281 = vmatpush1.msra.mxu0 0.0
        %2282 = vmatprep.subr.mxu0 0.0
        %2283 = vmatpush1.msra.mxu0 0.0
        %2284 = vmatprep.subr.mxu0 0.0
        %2285 = vmatpush1.msra.mxu0 0.0
        %2286 = vmatprep.subr.mxu0 0.0
        %2287 = vmatpush1.msra.mxu0 0.0
        %2288 = vmatprep.subr.mxu0 0.0
        %2289 = vmatpush1.msra.mxu0 0.0
        %2290 = vmatprep.subr.mxu0 0.0
        %2291 = vmatpush1.msra.mxu0 0.0
        %2292 = vmatprep.subr.mxu0 0.0
        %2293 = vmatpush1.msra.mxu0 0.0
        %2294 = vmatprep.subr.mxu0 0.0
        %2295 = vmatpush1.msra.mxu0 0.0
        %2296 = vmatprep.subr.mxu0 0.0
        %2297 = vmatpush1.msra.mxu0 0.0
        %2298 = vmatprep.mubr.f32.mxu0 0.0
        %2299 = vmatmul.mubr.f32.gmra.mrb[0].mxu0 %v2160
        %v2300 = vpop.f32.mrb[0].mxu0
        %v2301 = vadd.f32 %v2231, %v2300
        %v2302 = vpop.f32.mrb[0].mxu0
        %2303 = vdwg.mxu0
        %v2304 = vpack.c.bf16 %v2301, %v2301
        %v2305 = vld [vmem:[%s4] sm:$0xf]
        %v2306 = vld [vmem:[%s4 + $0x4] sm:$0xf]
        %v2307 = vld [vmem:[%s4 + $0x8] sm:$0xf]
        %v2308 = vld [vmem:[%s4 + $0xc] sm:$0xf]
        %v2309 = vld [vmem:[%s4 + $0x10] sm:$0xf]
        %v2310 = vld [vmem:[%s4 + $0x14] sm:$0xf]
        %v2311 = vld [vmem:[%s4 + $0x18] sm:$0xf]
        %v2312 = vld [vmem:[%s4 + $0x1c] sm:$0xf]
        %v2313 = vld [vmem:[%s4 + $0x20] sm:$0xf]
        %v2314 = vld [vmem:[%s4 + $0x24] sm:$0xf]
        %v2315 = vld [vmem:[%s4 + $0x28] sm:$0xf]
        %v2316 = vld [vmem:[%s4 + $0x2c] sm:$0xf]
        %v2317 = vld [vmem:[%s4 + $0x30] sm:$0xf]
        %v2318 = vld [vmem:[%s4 + $0x34] sm:$0xf]
        %v2319 = vld [vmem:[%s4 + $0x38] sm:$0xf]
        %v2320 = vld [vmem:[%s4 + $0x3c] sm:$0xf]
        %v2321 = vld [vmem:[%s5] sm:$0x1]
        %v2338 = vunpack.c.l.b16 %v2305
        %v2339 = vunpack.c.l.b16 %v2306
        %v2340 = vunpack.c.l.b16 %v2307
        %v2341 = vunpack.c.l.b16 %v2308
        %v2342 = vunpack.c.l.b16 %v2309
        %v2343 = vunpack.c.l.b16 %v2310
        %v2344 = vunpack.c.l.b16 %v2311
        %v2345 = vunpack.c.l.b16 %v2312
        %v2346 = vunpack.c.l.b16 %v2313
        %v2347 = vunpack.c.l.b16 %v2314
        %v2348 = vunpack.c.l.b16 %v2315
        %v2349 = vunpack.c.l.b16 %v2316
        %v2350 = vunpack.c.l.b16 %v2317
        %v2351 = vunpack.c.l.b16 %v2318
        %v2352 = vunpack.c.l.b16 %v2319
        %v2353 = vunpack.c.l.b16 %v2320
        %v2354 = vpack.c.b16 %v2339, %v2338
        %v2355 = vpack.c.b16 %v2341, %v2340
        %v2356 = vpack.c.b16 %v2343, %v2342
        %v2357 = vpack.c.b16 %v2345, %v2344
        %v2358 = vpack.c.b16 %v2347, %v2346
        %v2359 = vpack.c.b16 %v2349, %v2348
        %v2360 = vpack.c.b16 %v2351, %v2350
        %v2361 = vpack.c.b16 %v2353, %v2352
        %2370 = vmatprep.subr.bf16.mxu0 0
        %2371 = vmatpush1.bf16.msra.mxu0 %v2354
        %2372 = vmatprep.subr.bf16.mxu0 0
        %2373 = vmatpush1.bf16.msra.mxu0 %v2355
        %2374 = vmatprep.subr.bf16.mxu0 0
        %2375 = vmatpush1.bf16.msra.mxu0 %v2356
        %2376 = vmatprep.subr.bf16.mxu0 0
        %2377 = vmatpush1.bf16.msra.mxu0 %v2357
        %2378 = vmatprep.subr.bf16.mxu0 0
        %2379 = vmatpush1.bf16.msra.mxu0 %v2358
        %2380 = vmatprep.subr.bf16.mxu0 0
        %2381 = vmatpush1.bf16.msra.mxu0 %v2359
        %2382 = vmatprep.subr.bf16.mxu0 0
        %2383 = vmatpush1.bf16.msra.mxu0 %v2360
        %2384 = vmatprep.subr.bf16.mxu0 0
        %2385 = vmatpush1.bf16.msra.mxu0 %v2361
        %2386 = vmatprep.subr.bf16.mxu0 0
        %2387 = vmatpush1.bf16.msra.mxu0 0
        %2388 = vmatprep.subr.bf16.mxu0 0
        %2389 = vmatpush1.bf16.msra.mxu0 0
        %2390 = vmatprep.subr.bf16.mxu0 0
        %2391 = vmatpush1.bf16.msra.mxu0 0
        %2392 = vmatprep.subr.bf16.mxu0 0
        %2393 = vmatpush1.bf16.msra.mxu0 0
        %2394 = vmatprep.subr.bf16.mxu0 0
        %2395 = vmatpush1.bf16.msra.mxu0 0
        %2396 = vmatprep.subr.bf16.mxu0 0
        %2397 = vmatpush1.bf16.msra.mxu0 0
        %2398 = vmatprep.subr.bf16.mxu0 0
        %2399 = vmatpush1.bf16.msra.mxu0 0
        %2400 = vmatprep.subr.bf16.mxu0 0
        %2401 = vmatpush1.bf16.msra.mxu0 0
        %2402 = vmatprep.mubr.bf16.mxu0 0
        %2403 = vmatmul.mubr.bf16.gmra.mrb[0].mxu0 %v2304
        %v2404 = vpop.f32.mrb[0].mxu0
        %v2405 = vadd.f32 %v2321, %v2404
        %v2406 = vpop.f32.mrb[0].mxu0
        %v2407 = vpop.f32.mrb[0].mxu0
        %v2408 = vpop.f32.mrb[0].mxu0
        %2409 = vdwg.mxu0
        %2410 = vst [vmem:[%s243] sm:$0x1] %v2405
        %s2411 = sand.u32 %s159, 1
        %s2412 = scalar_lea.sflag [#allocation3], %s2411
        %s2413 = sand.u32 %s159, 1
        %s2414 = scalar_lea.vmem [#allocation2], %s2413
        // Predicated region
        $region45: #{tpu_custom_call.1} parent=43 // pred_check
          %p2415 = pneg %p169
        $region46: #{tpu_custom_call.1} parent=43 // pred_check_branch
          %2417 = sbr.rel (%p2415) target = $region48
        $region47: #{tpu_custom_call.1} parent=43 // pred_region
          %s2419 = ssub.s32 16, 16
          %2420 = vsyncadd %s2412, %s2419
          %s2421 = smul.addr %s20, 16
          %s2422 = scalar_lea.hbm %s6, %s2421
          %s2424 = sshll.u32 %s2414, 4
          %s2425 = int_to_ptr.vmem [resolvable:$true] %s2424
          %2427 = dma.vmem_to_hbm [thread:$0]  %s2425, 16, %s2422, %s2412
        $region48: #{tpu_custom_call.1} parent=43 // pred_fallthru
          _
      $region44: #{tpu_custom_call.1} parent=5 // pred_fallthru
        _
      %p2428 = scmp.le.s32.totalorder 2, %s15
      // Predicated region
      $region49: #{tpu_custom_call.1} parent=5 // pred_check
        %p2429 = pneg %p2428
      $region50: #{tpu_custom_call.1} parent=5 // pred_check_branch
        %2431 = sbr.rel (%p2429) target = $region52
      $region51: #{tpu_custom_call.1} parent=5 // pred_region
        %s2432 = ssub.s32 %s15, 2
        // Predicated region
        $region53: #{tpu_custom_call.1} parent=51 // pred_check
          %p2433 = pneg %p175
        $region54: #{tpu_custom_call.1} parent=51 // pred_check_branch
          %2435 = sbr.rel (%p2433) target = $region56
        $region55: #{tpu_custom_call.1} parent=51 // pred_region
          %s2436 = sand.u32 %s160, 1
          %s2437 = scalar_lea.sflag [#allocation3], %s2436
          %s2438 = sand.u32 %s160, 1
          %s2439 = scalar_lea.vmem [#allocation2], %s2438
          %2440 = dma.done %s2437, 16
        $region56: #{tpu_custom_call.1} parent=51 // pred_fallthru
          _
      $region52: #{tpu_custom_call.1} parent=5 // pred_fallthru
        _
    $region6: #{tpu_custom_call.1} parent=1 // loop_footer
      %s19 = sadd.s32 1, %s15
    $region7: #{tpu_custom_call.1} parent=1 // loop_footer_branch
      %14 = sbr.rel target = $region3
    $region8: #{tpu_custom_call.1} parent=1 // loop_exit
      _
    %2441 = vsyncpa [#allocation3], 1
    %s2442 = scalar_lea.sflag [#allocation3], 1
    %2443 = vsyncpa %s2442, 1

</llo_original>
